<compile_context>
chip_gen: v7x
topology: tpu7x:2x2x1
jax: 0.10.0
libtpu: 0.0.40
codegen_flags: <defaults>
</compile_context>

<pallas_src>
import jax
import jax.numpy as jnp
from jax.experimental import pallas as pl
from jax.experimental.pallas import tpu as pltpu


# ---------------------------------------------------------------------------
# Fused 2-layer GRU recurrence kernel (single invocation, in-kernel time loop)
# ---------------------------------------------------------------------------
def _encoder_gru_kernel(xg0_ref,            # (T, B, 3H) f32  precomputed layer-0 input gates
                        wh0_ref,            # (H, 3H)    bf16 layer-0 hidden->gates (fused, transposed)
                        bhn0_ref,           # (1, H)     f32  layer-0 b_hn
                        wi1_ref,            # (H, 3H)    bf16 layer-1 input->gates (fused, transposed)
                        bi1_ref,            # (1, 3H)    f32  layer-1 folded input bias
                        wh1_ref,            # (H, 3H)    bf16 layer-1 hidden->gates (fused, transposed)
                        bhn1_ref,           # (1, H)     f32  layer-1 b_hn
                        h0_ref,             # (B, H)     f32  out: final hidden, layer 0
                        h1_ref):            # (B, H)     f32  out: final hidden, layer 1
    T, B, G = xg0_ref.shape
    H = G // 3

    # Weights / biases loaded once, kept in vregs across the unrolled loop.
    wh0 = wh0_ref[...]
    wi1 = wi1_ref[...]
    wh1 = wh1_ref[...]
    bhn0 = bhn0_ref[...]
    bi1 = bi1_ref[...]
    bhn1 = bhn1_ref[...]

    def gru_cell(xg, h, wh, bhn):
        # xg already contains x-side gate pre-activations with biases folded
        # (r,z columns: b_i*+b_h*; n column: b_in only). Single fused hidden dot.
        hg = jnp.dot(h.astype(wh.dtype), wh, preferred_element_type=jnp.float32)
        r = jax.nn.sigmoid(xg[:, 0:H] + hg[:, 0:H])
        z = jax.nn.sigmoid(xg[:, H:2 * H] + hg[:, H:2 * H])
        n = jnp.tanh(xg[:, 2 * H:3 * H] + r * (hg[:, 2 * H:3 * H] + bhn))
        return (1.0 - z) * n + z * h

    def step(t, carry):
        h0, h1 = carry
        xg0 = xg0_ref[t]                                          # (B, 3H)
        h0n = gru_cell(xg0, h0, wh0, bhn0)                        # layer 0
        xg1 = jnp.dot(h0n.astype(wi1.dtype), wi1,                 # layer-1 input gates
                      preferred_element_type=jnp.float32) + bi1
        h1n = gru_cell(xg1, h1, wh1, bhn1)                        # layer 1
        return (h0n, h1n)

    h_init = (jnp.zeros((B, H), jnp.float32), jnp.zeros((B, H), jnp.float32))
    h0f, h1f = jax.lax.fori_loop(0, T, step, h_init, unroll=True)

    h0_ref[...] = h0f.astype(h0_ref.dtype)
    h1_ref[...] = h1f.astype(h1_ref.dtype)


# ---------------------------------------------------------------------------
# Parameter construction (PyTorch-style layout, then fused/transposed derivates)
# ---------------------------------------------------------------------------
def make_encoder_params(key, vocab, embedding_size, hidden_size):
    H = hidden_size
    bound = 1.0 / jnp.sqrt(jnp.float32(H))
    keys = jax.random.split(key, 9)

    def uni(k, shape):
        return jax.random.uniform(k, shape, jnp.float32, -bound, bound)

    emb = jax.random.normal(keys[0], (vocab, embedding_size), jnp.float32)

    # PyTorch nn.GRU params, gate row-order (r, z, n).
    w_ih0 = uni(keys[1], (3 * H, embedding_size)); w_hh0 = uni(keys[2], (3 * H, H))
    b_ih0 = uni(keys[3], (3 * H,));                b_hh0 = uni(keys[4], (3 * H,))
    w_ih1 = uni(keys[5], (3 * H, H));              w_hh1 = uni(keys[6], (3 * H, H))
    b_ih1 = uni(keys[7], (3 * H,));                b_hh1 = uni(keys[8], (3 * H,))

    def fold_bias(b_ih, b_hh):
        # r,z columns carry b_ih + b_hh; n column carries b_ih only (b_hn applied
        # inside the r * (.) term per PyTorch semantics).
        return jnp.concatenate([b_ih[0:H] + b_hh[0:H],
                                b_ih[H:2 * H] + b_hh[H:2 * H],
                                b_ih[2 * H:3 * H]]).reshape(1, 3 * H)

    return {
        "emb": emb,
        # layer 0 input path (precomputed in gate space in the wrapper, fp32)
        "wi0": w_ih0.T,                                   # (E, 3H)
        "bi0": fold_bias(b_ih0, b_hh0),                   # (1, 3H)
        # layer 0 hidden path (kernel, bf16 matmul operands)
        "wh0": w_hh0.T.astype(jnp.bfloat16),              # (H, 3H)
        "bhn0": b_hh0[2 * H:3 * H].reshape(1, H),         # (1, H)
        # layer 1 input + hidden paths (kernel)
        "wi1": w_ih1.T.astype(jnp.bfloat16),              # (H, 3H)
        "bi1": fold_bias(b_ih1, b_hh1),                   # (1, 3H)
        "wh1": w_hh1.T.astype(jnp.bfloat16),              # (H, 3H)
        "bhn1": b_hh1[2 * H:3 * H].reshape(1, H),         # (1, H)
    }


# ---------------------------------------------------------------------------
# Encoder forward (Pallas)
# ---------------------------------------------------------------------------
def encoder_forward(x_tokens, params):
    """x_tokens: (T, B) int32. Returns (hidden, cell) = (h_n[0], h_n[1])."""
    T, B = x_tokens.shape
    H = params["wh0"].shape[0]

    # Hoisted input-side GEMM: tiny vocab -> precompute the embedding in GATE space
    # (V, 3H) once and gather rows per token (dropout at eval is identity).
    # TODO(synk): training-mode dropout (embedding + inter-layer) not applied.
    gate_table = jnp.dot(params["emb"], params["wi0"],
                         preferred_element_type=jnp.float32) + params["bi0"]   # (V, 3H)
    xg0 = jnp.take(gate_table, x_tokens, axis=0)                               # (T, B, 3H)

    def vmem():
        return pl.BlockSpec(memory_space=pltpu.MemorySpace.VMEM)

    h0, h1 = pl.pallas_call(
        _encoder_gru_kernel,
        out_shape=(jax.ShapeDtypeStruct((B, H), jnp.float32),
                   jax.ShapeDtypeStruct((B, H), jnp.float32)),
        in_specs=[vmem() for _ in range(7)],
        out_specs=(vmem(), vmem()),
    )(xg0, params["wh0"], params["bhn0"],
      params["wi1"], params["bi1"], params["wh1"], params["bhn1"])
    return h0, h1                                                              # (hidden, cell)


# ---------------------------------------------------------------------------
# Pure-JAX reference (same fused params / mixed precision) for validation
# ---------------------------------------------------------------------------
def encoder_reference(x_tokens, params):
    T, B = x_tokens.shape
    H = params["wh0"].shape[0]
    gate_table = jnp.dot(params["emb"], params["wi0"],
                         preferred_element_type=jnp.float32) + params["bi0"]
    xg0 = jnp.take(gate_table, x_tokens, axis=0)

    def cell(xg, h, wh, bhn):
        hg = jnp.dot(h.astype(wh.dtype), wh, preferred_element_type=jnp.float32)
        r = jax.nn.sigmoid(xg[:, 0:H] + hg[:, 0:H])
        z = jax.nn.sigmoid(xg[:, H:2 * H] + hg[:, H:2 * H])
        n = jnp.tanh(xg[:, 2 * H:3 * H] + r * (hg[:, 2 * H:3 * H] + bhn))
        return (1.0 - z) * n + z * h

    h0 = jnp.zeros((B, H), jnp.float32)
    h1 = jnp.zeros((B, H), jnp.float32)
    for t in range(T):
        h0 = cell(xg0[t], h0, params["wh0"], params["bhn0"])
        xg1 = jnp.dot(h0.astype(params["wi1"].dtype), params["wi1"],
                      preferred_element_type=jnp.float32) + params["bi1"]
        h1 = cell(xg1, h1, params["wh1"], params["bhn1"])
    return h0, h1


if __name__ == "__main__":
    # Small shapes consistent with the module.
    input_size = 16        # vocab
    embedding_size = 32
    hidden_size = 32
    num_layers = 2         # required by the (hidden, cell) unpacking in forward
    seq_len, batch = 8, 2

    root = jax.random.PRNGKey(0)
    k_params, k_x = jax.random.split(root)

    params = make_encoder_params(k_params, input_size, embedding_size, hidden_size)
    x_tokens = jax.random.randint(k_x, (seq_len, batch), 0, input_size, jnp.int32)

    hidden, cell = jax.jit(encoder_forward)(x_tokens, params)
    jax.block_until_ready((hidden, cell))

    ref_h, ref_c = encoder_reference(x_tokens, params)

    assert hidden.shape == (batch, hidden_size)
    assert cell.shape == (batch, hidden_size)
    assert bool(jnp.all(jnp.isfinite(hidden))) and bool(jnp.all(jnp.isfinite(cell)))
    assert bool(jnp.allclose(hidden, ref_h, atol=1e-2, rtol=1e-2))
    assert bool(jnp.allclose(cell, ref_c, atol=1e-2, rtol=1e-2))
    print("KERNEL_OK")
</pallas_src>

<mosaic_0001>
module attributes {stable_mosaic.version = 11 : i64} {
  func.func @_encoder_gru_kernel(%arg0: memref<8x2x96xf32, #tpu.memory_space<vmem>>, %arg1: memref<32x96xbf16, #tpu.memory_space<vmem>>, %arg2: memref<1x32xf32, #tpu.memory_space<vmem>>, %arg3: memref<32x96xbf16, #tpu.memory_space<vmem>>, %arg4: memref<1x96xf32, #tpu.memory_space<vmem>>, %arg5: memref<32x96xbf16, #tpu.memory_space<vmem>>, %arg6: memref<1x32xf32, #tpu.memory_space<vmem>>, %arg7: memref<2x32xf32, #tpu.memory_space<vmem>>, %arg8: memref<2x32xf32, #tpu.memory_space<vmem>>) attributes {dimension_semantics = [], scalar_prefetch = 0 : i64, scratch_operands = 0 : i64, tpu.core_type = #tpu.core_type<tc>} {
    %c0 = arith.constant 0 : index
    %c0_0 = arith.constant 0 : index
    %0 = vector.load %arg1[%c0, %c0_0] : memref<32x96xbf16, #tpu.memory_space<vmem>>, vector<32x96xbf16>
    %c0_1 = arith.constant 0 : index
    %c0_2 = arith.constant 0 : index
    %1 = vector.load %arg3[%c0_1, %c0_2] : memref<32x96xbf16, #tpu.memory_space<vmem>>, vector<32x96xbf16>
    %c0_3 = arith.constant 0 : index
    %c0_4 = arith.constant 0 : index
    %2 = vector.load %arg5[%c0_3, %c0_4] : memref<32x96xbf16, #tpu.memory_space<vmem>>, vector<32x96xbf16>
    %c0_5 = arith.constant 0 : index
    %c0_6 = arith.constant 0 : index
    %3 = vector.load %arg2[%c0_5, %c0_6] : memref<1x32xf32, #tpu.memory_space<vmem>>, vector<1x32xf32>
    %c0_7 = arith.constant 0 : index
    %c0_8 = arith.constant 0 : index
    %4 = vector.load %arg4[%c0_7, %c0_8] : memref<1x96xf32, #tpu.memory_space<vmem>>, vector<1x96xf32>
    %c0_9 = arith.constant 0 : index
    %c0_10 = arith.constant 0 : index
    %5 = vector.load %arg6[%c0_9, %c0_10] : memref<1x32xf32, #tpu.memory_space<vmem>>, vector<1x32xf32>
    %cst = arith.constant 0.000000e+00 : f32
    %6 = vector.broadcast %cst : f32 to vector<2x32xf32>
    %cst_11 = arith.constant 0.000000e+00 : f32
    %7 = vector.broadcast %cst_11 : f32 to vector<2x32xf32>
    %c0_i32 = arith.constant 0 : i32
    %8 = arith.index_cast %c0_i32 : i32 to index
    %c0_12 = arith.constant 0 : index
    %c0_13 = arith.constant 0 : index
    %9 = vector.load %arg0[%8, %c0_12, %c0_13] : memref<8x2x96xf32, #tpu.memory_space<vmem>>, vector<1x2x96xf32>
    %10 = vector.shape_cast %9 : vector<1x2x96xf32> to vector<2x96xf32>
    %11 = arith.truncf %6 : vector<2x32xf32> to vector<2x32xbf16>
    %cst_14 = arith.constant dense<0.000000e+00> : vector<2x96xf32>
    %12 = tpu.matmul %11, %0, %cst_14 {dimension_numbers = #tpu.dot_dimension_numbers<[1], [0], [0], [1], [0, 0, 1, 1], [], []>} : vector<2x32xbf16>, vector<32x96xbf16>, vector<2x96xf32> -> vector<2x96xf32>
    %13 = vector.extract_strided_slice %10 {offsets = [0, 0], sizes = [2, 32], strides = [1, 1]} : vector<2x96xf32> to vector<2x32xf32>
    %14 = vector.extract_strided_slice %12 {offsets = [0, 0], sizes = [2, 32], strides = [1, 1]} : vector<2x96xf32> to vector<2x32xf32>
    %15 = arith.addf %13, %14 : vector<2x32xf32>
    %16 = arith.negf %15 : vector<2x32xf32>
    %17 = math.exp %16 : vector<2x32xf32>
    %cst_15 = arith.constant 1.000000e+00 : f32
    %18 = vector.broadcast %cst_15 : f32 to vector<2x32xf32>
    %19 = arith.addf %18, %17 : vector<2x32xf32>
    %20 = arith.divf %18, %19 : vector<2x32xf32>
    %21 = vector.extract_strided_slice %10 {offsets = [0, 32], sizes = [2, 32], strides = [1, 1]} : vector<2x96xf32> to vector<2x32xf32>
    %22 = vector.extract_strided_slice %12 {offsets = [0, 32], sizes = [2, 32], strides = [1, 1]} : vector<2x96xf32> to vector<2x32xf32>
    %23 = arith.addf %21, %22 : vector<2x32xf32>
    %24 = arith.negf %23 : vector<2x32xf32>
    %25 = math.exp %24 : vector<2x32xf32>
    %cst_16 = arith.constant 1.000000e+00 : f32
    %26 = vector.broadcast %cst_16 : f32 to vector<2x32xf32>
    %27 = arith.addf %26, %25 : vector<2x32xf32>
    %28 = arith.divf %26, %27 : vector<2x32xf32>
    %29 = vector.extract_strided_slice %10 {offsets = [0, 64], sizes = [2, 32], strides = [1, 1]} : vector<2x96xf32> to vector<2x32xf32>
    %30 = vector.extract_strided_slice %12 {offsets = [0, 64], sizes = [2, 32], strides = [1, 1]} : vector<2x96xf32> to vector<2x32xf32>
    %31 = vector.broadcast %3 : vector<1x32xf32> to vector<2x32xf32>
    %32 = arith.addf %30, %31 : vector<2x32xf32>
    %33 = arith.mulf %20, %32 : vector<2x32xf32>
    %34 = arith.addf %29, %33 : vector<2x32xf32>
    %35 = math.tanh %34 : vector<2x32xf32>
    %cst_17 = arith.constant 1.000000e+00 : f32
    %36 = vector.broadcast %cst_17 : f32 to vector<2x32xf32>
    %37 = arith.subf %36, %28 : vector<2x32xf32>
    %38 = arith.mulf %37, %35 : vector<2x32xf32>
    %39 = arith.mulf %28, %6 : vector<2x32xf32>
    %40 = arith.addf %38, %39 : vector<2x32xf32>
    %41 = arith.truncf %40 : vector<2x32xf32> to vector<2x32xbf16>
    %cst_18 = arith.constant dense<0.000000e+00> : vector<2x96xf32>
    %42 = tpu.matmul %41, %1, %cst_18 {dimension_numbers = #tpu.dot_dimension_numbers<[1], [0], [0], [1], [0, 0, 1, 1], [], []>} : vector<2x32xbf16>, vector<32x96xbf16>, vector<2x96xf32> -> vector<2x96xf32>
    %43 = vector.broadcast %4 : vector<1x96xf32> to vector<2x96xf32>
    %44 = arith.addf %42, %43 : vector<2x96xf32>
    %45 = arith.truncf %7 : vector<2x32xf32> to vector<2x32xbf16>
    %cst_19 = arith.constant dense<0.000000e+00> : vector<2x96xf32>
    %46 = tpu.matmul %45, %2, %cst_19 {dimension_numbers = #tpu.dot_dimension_numbers<[1], [0], [0], [1], [0, 0, 1, 1], [], []>} : vector<2x32xbf16>, vector<32x96xbf16>, vector<2x96xf32> -> vector<2x96xf32>
    %47 = vector.extract_strided_slice %44 {offsets = [0, 0], sizes = [2, 32], strides = [1, 1]} : vector<2x96xf32> to vector<2x32xf32>
    %48 = vector.extract_strided_slice %46 {offsets = [0, 0], sizes = [2, 32], strides = [1, 1]} : vector<2x96xf32> to vector<2x32xf32>
    %49 = arith.addf %47, %48 : vector<2x32xf32>
    %50 = arith.negf %49 : vector<2x32xf32>
    %51 = math.exp %50 : vector<2x32xf32>
    %cst_20 = arith.constant 1.000000e+00 : f32
    %52 = vector.broadcast %cst_20 : f32 to vector<2x32xf32>
    %53 = arith.addf %52, %51 : vector<2x32xf32>
    %54 = arith.divf %52, %53 : vector<2x32xf32>
    %55 = vector.extract_strided_slice %44 {offsets = [0, 32], sizes = [2, 32], strides = [1, 1]} : vector<2x96xf32> to vector<2x32xf32>
    %56 = vector.extract_strided_slice %46 {offsets = [0, 32], sizes = [2, 32], strides = [1, 1]} : vector<2x96xf32> to vector<2x32xf32>
    %57 = arith.addf %55, %56 : vector<2x32xf32>
    %58 = arith.negf %57 : vector<2x32xf32>
    %59 = math.exp %58 : vector<2x32xf32>
    %cst_21 = arith.constant 1.000000e+00 : f32
    %60 = vector.broadcast %cst_21 : f32 to vector<2x32xf32>
    %61 = arith.addf %60, %59 : vector<2x32xf32>
    %62 = arith.divf %60, %61 : vector<2x32xf32>
    %63 = vector.extract_strided_slice %44 {offsets = [0, 64], sizes = [2, 32], strides = [1, 1]} : vector<2x96xf32> to vector<2x32xf32>
    %64 = vector.extract_strided_slice %46 {offsets = [0, 64], sizes = [2, 32], strides = [1, 1]} : vector<2x96xf32> to vector<2x32xf32>
    %65 = vector.broadcast %5 : vector<1x32xf32> to vector<2x32xf32>
    %66 = arith.addf %64, %65 : vector<2x32xf32>
    %67 = arith.mulf %54, %66 : vector<2x32xf32>
    %68 = arith.addf %63, %67 : vector<2x32xf32>
    %69 = math.tanh %68 : vector<2x32xf32>
    %cst_22 = arith.constant 1.000000e+00 : f32
    %70 = vector.broadcast %cst_22 : f32 to vector<2x32xf32>
    %71 = arith.subf %70, %62 : vector<2x32xf32>
    %72 = arith.mulf %71, %69 : vector<2x32xf32>
    %73 = arith.mulf %62, %7 : vector<2x32xf32>
    %74 = arith.addf %72, %73 : vector<2x32xf32>
    %c1_i32 = arith.constant 1 : i32
    %75 = arith.index_cast %c1_i32 : i32 to index
    %c0_23 = arith.constant 0 : index
    %c0_24 = arith.constant 0 : index
    %76 = vector.load %arg0[%75, %c0_23, %c0_24] : memref<8x2x96xf32, #tpu.memory_space<vmem>>, vector<1x2x96xf32>
    %77 = vector.shape_cast %76 : vector<1x2x96xf32> to vector<2x96xf32>
    %78 = arith.truncf %40 : vector<2x32xf32> to vector<2x32xbf16>
    %cst_25 = arith.constant dense<0.000000e+00> : vector<2x96xf32>
    %79 = tpu.matmul %78, %0, %cst_25 {dimension_numbers = #tpu.dot_dimension_numbers<[1], [0], [0], [1], [0, 0, 1, 1], [], []>} : vector<2x32xbf16>, vector<32x96xbf16>, vector<2x96xf32> -> vector<2x96xf32>
    %80 = vector.extract_strided_slice %77 {offsets = [0, 0], sizes = [2, 32], strides = [1, 1]} : vector<2x96xf32> to vector<2x32xf32>
    %81 = vector.extract_strided_slice %79 {offsets = [0, 0], sizes = [2, 32], strides = [1, 1]} : vector<2x96xf32> to vector<2x32xf32>
    %82 = arith.addf %80, %81 : vector<2x32xf32>
    %83 = arith.negf %82 : vector<2x32xf32>
    %84 = math.exp %83 : vector<2x32xf32>
    %cst_26 = arith.constant 1.000000e+00 : f32
    %85 = vector.broadcast %cst_26 : f32 to vector<2x32xf32>
    %86 = arith.addf %85, %84 : vector<2x32xf32>
    %87 = arith.divf %85, %86 : vector<2x32xf32>
    %88 = vector.extract_strided_slice %77 {offsets = [0, 32], sizes = [2, 32], strides = [1, 1]} : vector<2x96xf32> to vector<2x32xf32>
    %89 = vector.extract_strided_slice %79 {offsets = [0, 32], sizes = [2, 32], strides = [1, 1]} : vector<2x96xf32> to vector<2x32xf32>
    %90 = arith.addf %88, %89 : vector<2x32xf32>
    %91 = arith.negf %90 : vector<2x32xf32>
    %92 = math.exp %91 : vector<2x32xf32>
    %cst_27 = arith.constant 1.000000e+00 : f32
    %93 = vector.broadcast %cst_27 : f32 to vector<2x32xf32>
    %94 = arith.addf %93, %92 : vector<2x32xf32>
    %95 = arith.divf %93, %94 : vector<2x32xf32>
    %96 = vector.extract_strided_slice %77 {offsets = [0, 64], sizes = [2, 32], strides = [1, 1]} : vector<2x96xf32> to vector<2x32xf32>
    %97 = vector.extract_strided_slice %79 {offsets = [0, 64], sizes = [2, 32], strides = [1, 1]} : vector<2x96xf32> to vector<2x32xf32>
    %98 = vector.broadcast %3 : vector<1x32xf32> to vector<2x32xf32>
    %99 = arith.addf %97, %98 : vector<2x32xf32>
    %100 = arith.mulf %87, %99 : vector<2x32xf32>
    %101 = arith.addf %96, %100 : vector<2x32xf32>
    %102 = math.tanh %101 : vector<2x32xf32>
    %cst_28 = arith.constant 1.000000e+00 : f32
    %103 = vector.broadcast %cst_28 : f32 to vector<2x32xf32>
    %104 = arith.subf %103, %95 : vector<2x32xf32>
    %105 = arith.mulf %104, %102 : vector<2x32xf32>
    %106 = arith.mulf %95, %40 : vector<2x32xf32>
    %107 = arith.addf %105, %106 : vector<2x32xf32>
    %108 = arith.truncf %107 : vector<2x32xf32> to vector<2x32xbf16>
    %cst_29 = arith.constant dense<0.000000e+00> : vector<2x96xf32>
    %109 = tpu.matmul %108, %1, %cst_29 {dimension_numbers = #tpu.dot_dimension_numbers<[1], [0], [0], [1], [0, 0, 1, 1], [], []>} : vector<2x32xbf16>, vector<32x96xbf16>, vector<2x96xf32> -> vector<2x96xf32>
    %110 = vector.broadcast %4 : vector<1x96xf32> to vector<2x96xf32>
    %111 = arith.addf %109, %110 : vector<2x96xf32>
    %112 = arith.truncf %74 : vector<2x32xf32> to vector<2x32xbf16>
    %cst_30 = arith.constant dense<0.000000e+00> : vector<2x96xf32>
    %113 = tpu.matmul %112, %2, %cst_30 {dimension_numbers = #tpu.dot_dimension_numbers<[1], [0], [0], [1], [0, 0, 1, 1], [], []>} : vector<2x32xbf16>, vector<32x96xbf16>, vector<2x96xf32> -> vector<2x96xf32>
    %114 = vector.extract_strided_slice %111 {offsets = [0, 0], sizes = [2, 32], strides = [1, 1]} : vector<2x96xf32> to vector<2x32xf32>
    %115 = vector.extract_strided_slice %113 {offsets = [0, 0], sizes = [2, 32], strides = [1, 1]} : vector<2x96xf32> to vector<2x32xf32>
    %116 = arith.addf %114, %115 : vector<2x32xf32>
    %117 = arith.negf %116 : vector<2x32xf32>
    %118 = math.exp %117 : vector<2x32xf32>
    %cst_31 = arith.constant 1.000000e+00 : f32
    %119 = vector.broadcast %cst_31 : f32 to vector<2x32xf32>
    %120 = arith.addf %119, %118 : vector<2x32xf32>
    %121 = arith.divf %119, %120 : vector<2x32xf32>
    %122 = vector.extract_strided_slice %111 {offsets = [0, 32], sizes = [2, 32], strides = [1, 1]} : vector<2x96xf32> to vector<2x32xf32>
    %123 = vector.extract_strided_slice %113 {offsets = [0, 32], sizes = [2, 32], strides = [1, 1]} : vector<2x96xf32> to vector<2x32xf32>
    %124 = arith.addf %122, %123 : vector<2x32xf32>
    %125 = arith.negf %124 : vector<2x32xf32>
    %126 = math.exp %125 : vector<2x32xf32>
    %cst_32 = arith.constant 1.000000e+00 : f32
    %127 = vector.broadcast %cst_32 : f32 to vector<2x32xf32>
    %128 = arith.addf %127, %126 : vector<2x32xf32>
    %129 = arith.divf %127, %128 : vector<2x32xf32>
    %130 = vector.extract_strided_slice %111 {offsets = [0, 64], sizes = [2, 32], strides = [1, 1]} : vector<2x96xf32> to vector<2x32xf32>
    %131 = vector.extract_strided_slice %113 {offsets = [0, 64], sizes = [2, 32], strides = [1, 1]} : vector<2x96xf32> to vector<2x32xf32>
    %132 = vector.broadcast %5 : vector<1x32xf32> to vector<2x32xf32>
    %133 = arith.addf %131, %132 : vector<2x32xf32>
    %134 = arith.mulf %121, %133 : vector<2x32xf32>
    %135 = arith.addf %130, %134 : vector<2x32xf32>
    %136 = math.tanh %135 : vector<2x32xf32>
    %cst_33 = arith.constant 1.000000e+00 : f32
    %137 = vector.broadcast %cst_33 : f32 to vector<2x32xf32>
    %138 = arith.subf %137, %129 : vector<2x32xf32>
    %139 = arith.mulf %138, %136 : vector<2x32xf32>
    %140 = arith.mulf %129, %74 : vector<2x32xf32>
    %141 = arith.addf %139, %140 : vector<2x32xf32>
    %c2_i32 = arith.constant 2 : i32
    %142 = arith.index_cast %c2_i32 : i32 to index
    %c0_34 = arith.constant 0 : index
    %c0_35 = arith.constant 0 : index
    %143 = vector.load %arg0[%142, %c0_34, %c0_35] : memref<8x2x96xf32, #tpu.memory_space<vmem>>, vector<1x2x96xf32>
    %144 = vector.shape_cast %143 : vector<1x2x96xf32> to vector<2x96xf32>
    %145 = arith.truncf %107 : vector<2x32xf32> to vector<2x32xbf16>
    %cst_36 = arith.constant dense<0.000000e+00> : vector<2x96xf32>
    %146 = tpu.matmul %145, %0, %cst_36 {dimension_numbers = #tpu.dot_dimension_numbers<[1], [0], [0], [1], [0, 0, 1, 1], [], []>} : vector<2x32xbf16>, vector<32x96xbf16>, vector<2x96xf32> -> vector<2x96xf32>
    %147 = vector.extract_strided_slice %144 {offsets = [0, 0], sizes = [2, 32], strides = [1, 1]} : vector<2x96xf32> to vector<2x32xf32>
    %148 = vector.extract_strided_slice %146 {offsets = [0, 0], sizes = [2, 32], strides = [1, 1]} : vector<2x96xf32> to vector<2x32xf32>
    %149 = arith.addf %147, %148 : vector<2x32xf32>
    %150 = arith.negf %149 : vector<2x32xf32>
    %151 = math.exp %150 : vector<2x32xf32>
    %cst_37 = arith.constant 1.000000e+00 : f32
    %152 = vector.broadcast %cst_37 : f32 to vector<2x32xf32>
    %153 = arith.addf %152, %151 : vector<2x32xf32>
    %154 = arith.divf %152, %153 : vector<2x32xf32>
    %155 = vector.extract_strided_slice %144 {offsets = [0, 32], sizes = [2, 32], strides = [1, 1]} : vector<2x96xf32> to vector<2x32xf32>
    %156 = vector.extract_strided_slice %146 {offsets = [0, 32], sizes = [2, 32], strides = [1, 1]} : vector<2x96xf32> to vector<2x32xf32>
    %157 = arith.addf %155, %156 : vector<2x32xf32>
    %158 = arith.negf %157 : vector<2x32xf32>
    %159 = math.exp %158 : vector<2x32xf32>
    %cst_38 = arith.constant 1.000000e+00 : f32
    %160 = vector.broadcast %cst_38 : f32 to vector<2x32xf32>
    %161 = arith.addf %160, %159 : vector<2x32xf32>
    %162 = arith.divf %160, %161 : vector<2x32xf32>
    %163 = vector.extract_strided_slice %144 {offsets = [0, 64], sizes = [2, 32], strides = [1, 1]} : vector<2x96xf32> to vector<2x32xf32>
    %164 = vector.extract_strided_slice %146 {offsets = [0, 64], sizes = [2, 32], strides = [1, 1]} : vector<2x96xf32> to vector<2x32xf32>
    %165 = vector.broadcast %3 : vector<1x32xf32> to vector<2x32xf32>
    %166 = arith.addf %164, %165 : vector<2x32xf32>
    %167 = arith.mulf %154, %166 : vector<2x32xf32>
    %168 = arith.addf %163, %167 : vector<2x32xf32>
    %169 = math.tanh %168 : vector<2x32xf32>
    %cst_39 = arith.constant 1.000000e+00 : f32
    %170 = vector.broadcast %cst_39 : f32 to vector<2x32xf32>
    %171 = arith.subf %170, %162 : vector<2x32xf32>
    %172 = arith.mulf %171, %169 : vector<2x32xf32>
    %173 = arith.mulf %162, %107 : vector<2x32xf32>
    %174 = arith.addf %172, %173 : vector<2x32xf32>
    %175 = arith.truncf %174 : vector<2x32xf32> to vector<2x32xbf16>
    %cst_40 = arith.constant dense<0.000000e+00> : vector<2x96xf32>
    %176 = tpu.matmul %175, %1, %cst_40 {dimension_numbers = #tpu.dot_dimension_numbers<[1], [0], [0], [1], [0, 0, 1, 1], [], []>} : vector<2x32xbf16>, vector<32x96xbf16>, vector<2x96xf32> -> vector<2x96xf32>
    %177 = vector.broadcast %4 : vector<1x96xf32> to vector<2x96xf32>
    %178 = arith.addf %176, %177 : vector<2x96xf32>
    %179 = arith.truncf %141 : vector<2x32xf32> to vector<2x32xbf16>
    %cst_41 = arith.constant dense<0.000000e+00> : vector<2x96xf32>
    %180 = tpu.matmul %179, %2, %cst_41 {dimension_numbers = #tpu.dot_dimension_numbers<[1], [0], [0], [1], [0, 0, 1, 1], [], []>} : vector<2x32xbf16>, vector<32x96xbf16>, vector<2x96xf32> -> vector<2x96xf32>
    %181 = vector.extract_strided_slice %178 {offsets = [0, 0], sizes = [2, 32], strides = [1, 1]} : vector<2x96xf32> to vector<2x32xf32>
    %182 = vector.extract_strided_slice %180 {offsets = [0, 0], sizes = [2, 32], strides = [1, 1]} : vector<2x96xf32> to vector<2x32xf32>
    %183 = arith.addf %181, %182 : vector<2x32xf32>
    %184 = arith.negf %183 : vector<2x32xf32>
    %185 = math.exp %184 : vector<2x32xf32>
    %cst_42 = arith.constant 1.000000e+00 : f32
    %186 = vector.broadcast %cst_42 : f32 to vector<2x32xf32>
    %187 = arith.addf %186, %185 : vector<2x32xf32>
    %188 = arith.divf %186, %187 : vector<2x32xf32>
    %189 = vector.extract_strided_slice %178 {offsets = [0, 32], sizes = [2, 32], strides = [1, 1]} : vector<2x96xf32> to vector<2x32xf32>
    %190 = vector.extract_strided_slice %180 {offsets = [0, 32], sizes = [2, 32], strides = [1, 1]} : vector<2x96xf32> to vector<2x32xf32>
    %191 = arith.addf %189, %190 : vector<2x32xf32>
    %192 = arith.negf %191 : vector<2x32xf32>
    %193 = math.exp %192 : vector<2x32xf32>
    %cst_43 = arith.constant 1.000000e+00 : f32
    %194 = vector.broadcast %cst_43 : f32 to vector<2x32xf32>
    %195 = arith.addf %194, %193 : vector<2x32xf32>
    %196 = arith.divf %194, %195 : vector<2x32xf32>
    %197 = vector.extract_strided_slice %178 {offsets = [0, 64], sizes = [2, 32], strides = [1, 1]} : vector<2x96xf32> to vector<2x32xf32>
    %198 = vector.extract_strided_slice %180 {offsets = [0, 64], sizes = [2, 32], strides = [1, 1]} : vector<2x96xf32> to vector<2x32xf32>
    %199 = vector.broadcast %5 : vector<1x32xf32> to vector<2x32xf32>
    %200 = arith.addf %198, %199 : vector<2x32xf32>
    %201 = arith.mulf %188, %200 : vector<2x32xf32>
    %202 = arith.addf %197, %201 : vector<2x32xf32>
    %203 = math.tanh %202 : vector<2x32xf32>
    %cst_44 = arith.constant 1.000000e+00 : f32
    %204 = vector.broadcast %cst_44 : f32 to vector<2x32xf32>
    %205 = arith.subf %204, %196 : vector<2x32xf32>
    %206 = arith.mulf %205, %203 : vector<2x32xf32>
    %207 = arith.mulf %196, %141 : vector<2x32xf32>
    %208 = arith.addf %206, %207 : vector<2x32xf32>
    %c3_i32 = arith.constant 3 : i32
    %209 = arith.index_cast %c3_i32 : i32 to index
    %c0_45 = arith.constant 0 : index
    %c0_46 = arith.constant 0 : index
    %210 = vector.load %arg0[%209, %c0_45, %c0_46] : memref<8x2x96xf32, #tpu.memory_space<vmem>>, vector<1x2x96xf32>
    %211 = vector.shape_cast %210 : vector<1x2x96xf32> to vector<2x96xf32>
    %212 = arith.truncf %174 : vector<2x32xf32> to vector<2x32xbf16>
    %cst_47 = arith.constant dense<0.000000e+00> : vector<2x96xf32>
    %213 = tpu.matmul %212, %0, %cst_47 {dimension_numbers = #tpu.dot_dimension_numbers<[1], [0], [0], [1], [0, 0, 1, 1], [], []>} : vector<2x32xbf16>, vector<32x96xbf16>, vector<2x96xf32> -> vector<2x96xf32>
    %214 = vector.extract_strided_slice %211 {offsets = [0, 0], sizes = [2, 32], strides = [1, 1]} : vector<2x96xf32> to vector<2x32xf32>
    %215 = vector.extract_strided_slice %213 {offsets = [0, 0], sizes = [2, 32], strides = [1, 1]} : vector<2x96xf32> to vector<2x32xf32>
    %216 = arith.addf %214, %215 : vector<2x32xf32>
    %217 = arith.negf %216 : vector<2x32xf32>
    %218 = math.exp %217 : vector<2x32xf32>
    %cst_48 = arith.constant 1.000000e+00 : f32
    %219 = vector.broadcast %cst_48 : f32 to vector<2x32xf32>
    %220 = arith.addf %219, %218 : vector<2x32xf32>
    %221 = arith.divf %219, %220 : vector<2x32xf32>
    %222 = vector.extract_strided_slice %211 {offsets = [0, 32], sizes = [2, 32], strides = [1, 1]} : vector<2x96xf32> to vector<2x32xf32>
    %223 = vector.extract_strided_slice %213 {offsets = [0, 32], sizes = [2, 32], strides = [1, 1]} : vector<2x96xf32> to vector<2x32xf32>
    %224 = arith.addf %222, %223 : vector<2x32xf32>
    %225 = arith.negf %224 : vector<2x32xf32>
    %226 = math.exp %225 : vector<2x32xf32>
    %cst_49 = arith.constant 1.000000e+00 : f32
    %227 = vector.broadcast %cst_49 : f32 to vector<2x32xf32>
    %228 = arith.addf %227, %226 : vector<2x32xf32>
    %229 = arith.divf %227, %228 : vector<2x32xf32>
    %230 = vector.extract_strided_slice %211 {offsets = [0, 64], sizes = [2, 32], strides = [1, 1]} : vector<2x96xf32> to vector<2x32xf32>
    %231 = vector.extract_strided_slice %213 {offsets = [0, 64], sizes = [2, 32], strides = [1, 1]} : vector<2x96xf32> to vector<2x32xf32>
    %232 = vector.broadcast %3 : vector<1x32xf32> to vector<2x32xf32>
    %233 = arith.addf %231, %232 : vector<2x32xf32>
    %234 = arith.mulf %221, %233 : vector<2x32xf32>
    %235 = arith.addf %230, %234 : vector<2x32xf32>
    %236 = math.tanh %235 : vector<2x32xf32>
    %cst_50 = arith.constant 1.000000e+00 : f32
    %237 = vector.broadcast %cst_50 : f32 to vector<2x32xf32>
    %238 = arith.subf %237, %229 : vector<2x32xf32>
    %239 = arith.mulf %238, %236 : vector<2x32xf32>
    %240 = arith.mulf %229, %174 : vector<2x32xf32>
    %241 = arith.addf %239, %240 : vector<2x32xf32>
    %242 = arith.truncf %241 : vector<2x32xf32> to vector<2x32xbf16>
    %cst_51 = arith.constant dense<0.000000e+00> : vector<2x96xf32>
    %243 = tpu.matmul %242, %1, %cst_51 {dimension_numbers = #tpu.dot_dimension_numbers<[1], [0], [0], [1], [0, 0, 1, 1], [], []>} : vector<2x32xbf16>, vector<32x96xbf16>, vector<2x96xf32> -> vector<2x96xf32>
    %244 = vector.broadcast %4 : vector<1x96xf32> to vector<2x96xf32>
    %245 = arith.addf %243, %244 : vector<2x96xf32>
    %246 = arith.truncf %208 : vector<2x32xf32> to vector<2x32xbf16>
    %cst_52 = arith.constant dense<0.000000e+00> : vector<2x96xf32>
    %247 = tpu.matmul %246, %2, %cst_52 {dimension_numbers = #tpu.dot_dimension_numbers<[1], [0], [0], [1], [0, 0, 1, 1], [], []>} : vector<2x32xbf16>, vector<32x96xbf16>, vector<2x96xf32> -> vector<2x96xf32>
    %248 = vector.extract_strided_slice %245 {offsets = [0, 0], sizes = [2, 32], strides = [1, 1]} : vector<2x96xf32> to vector<2x32xf32>
    %249 = vector.extract_strided_slice %247 {offsets = [0, 0], sizes = [2, 32], strides = [1, 1]} : vector<2x96xf32> to vector<2x32xf32>
    %250 = arith.addf %248, %249 : vector<2x32xf32>
    %251 = arith.negf %250 : vector<2x32xf32>
    %252 = math.exp %251 : vector<2x32xf32>
    %cst_53 = arith.constant 1.000000e+00 : f32
    %253 = vector.broadcast %cst_53 : f32 to vector<2x32xf32>
    %254 = arith.addf %253, %252 : vector<2x32xf32>
    %255 = arith.divf %253, %254 : vector<2x32xf32>
    %256 = vector.extract_strided_slice %245 {offsets = [0, 32], sizes = [2, 32], strides = [1, 1]} : vector<2x96xf32> to vector<2x32xf32>
    %257 = vector.extract_strided_slice %247 {offsets = [0, 32], sizes = [2, 32], strides = [1, 1]} : vector<2x96xf32> to vector<2x32xf32>
    %258 = arith.addf %256, %257 : vector<2x32xf32>
    %259 = arith.negf %258 : vector<2x32xf32>
    %260 = math.exp %259 : vector<2x32xf32>
    %cst_54 = arith.constant 1.000000e+00 : f32
    %261 = vector.broadcast %cst_54 : f32 to vector<2x32xf32>
    %262 = arith.addf %261, %260 : vector<2x32xf32>
    %263 = arith.divf %261, %262 : vector<2x32xf32>
    %264 = vector.extract_strided_slice %245 {offsets = [0, 64], sizes = [2, 32], strides = [1, 1]} : vector<2x96xf32> to vector<2x32xf32>
    %265 = vector.extract_strided_slice %247 {offsets = [0, 64], sizes = [2, 32], strides = [1, 1]} : vector<2x96xf32> to vector<2x32xf32>
    %266 = vector.broadcast %5 : vector<1x32xf32> to vector<2x32xf32>
    %267 = arith.addf %265, %266 : vector<2x32xf32>
    %268 = arith.mulf %255, %267 : vector<2x32xf32>
    %269 = arith.addf %264, %268 : vector<2x32xf32>
    %270 = math.tanh %269 : vector<2x32xf32>
    %cst_55 = arith.constant 1.000000e+00 : f32
    %271 = vector.broadcast %cst_55 : f32 to vector<2x32xf32>
    %272 = arith.subf %271, %263 : vector<2x32xf32>
    %273 = arith.mulf %272, %270 : vector<2x32xf32>
    %274 = arith.mulf %263, %208 : vector<2x32xf32>
    %275 = arith.addf %273, %274 : vector<2x32xf32>
    %c4_i32 = arith.constant 4 : i32
    %276 = arith.index_cast %c4_i32 : i32 to index
    %c0_56 = arith.constant 0 : index
    %c0_57 = arith.constant 0 : index
    %277 = vector.load %arg0[%276, %c0_56, %c0_57] : memref<8x2x96xf32, #tpu.memory_space<vmem>>, vector<1x2x96xf32>
    %278 = vector.shape_cast %277 : vector<1x2x96xf32> to vector<2x96xf32>
    %279 = arith.truncf %241 : vector<2x32xf32> to vector<2x32xbf16>
    %cst_58 = arith.constant dense<0.000000e+00> : vector<2x96xf32>
    %280 = tpu.matmul %279, %0, %cst_58 {dimension_numbers = #tpu.dot_dimension_numbers<[1], [0], [0], [1], [0, 0, 1, 1], [], []>} : vector<2x32xbf16>, vector<32x96xbf16>, vector<2x96xf32> -> vector<2x96xf32>
    %281 = vector.extract_strided_slice %278 {offsets = [0, 0], sizes = [2, 32], strides = [1, 1]} : vector<2x96xf32> to vector<2x32xf32>
    %282 = vector.extract_strided_slice %280 {offsets = [0, 0], sizes = [2, 32], strides = [1, 1]} : vector<2x96xf32> to vector<2x32xf32>
    %283 = arith.addf %281, %282 : vector<2x32xf32>
    %284 = arith.negf %283 : vector<2x32xf32>
    %285 = math.exp %284 : vector<2x32xf32>
    %cst_59 = arith.constant 1.000000e+00 : f32
    %286 = vector.broadcast %cst_59 : f32 to vector<2x32xf32>
    %287 = arith.addf %286, %285 : vector<2x32xf32>
    %288 = arith.divf %286, %287 : vector<2x32xf32>
    %289 = vector.extract_strided_slice %278 {offsets = [0, 32], sizes = [2, 32], strides = [1, 1]} : vector<2x96xf32> to vector<2x32xf32>
    %290 = vector.extract_strided_slice %280 {offsets = [0, 32], sizes = [2, 32], strides = [1, 1]} : vector<2x96xf32> to vector<2x32xf32>
    %291 = arith.addf %289, %290 : vector<2x32xf32>
    %292 = arith.negf %291 : vector<2x32xf32>
    %293 = math.exp %292 : vector<2x32xf32>
    %cst_60 = arith.constant 1.000000e+00 : f32
    %294 = vector.broadcast %cst_60 : f32 to vector<2x32xf32>
    %295 = arith.addf %294, %293 : vector<2x32xf32>
    %296 = arith.divf %294, %295 : vector<2x32xf32>
    %297 = vector.extract_strided_slice %278 {offsets = [0, 64], sizes = [2, 32], strides = [1, 1]} : vector<2x96xf32> to vector<2x32xf32>
    %298 = vector.extract_strided_slice %280 {offsets = [0, 64], sizes = [2, 32], strides = [1, 1]} : vector<2x96xf32> to vector<2x32xf32>
    %299 = vector.broadcast %3 : vector<1x32xf32> to vector<2x32xf32>
    %300 = arith.addf %298, %299 : vector<2x32xf32>
    %301 = arith.mulf %288, %300 : vector<2x32xf32>
    %302 = arith.addf %297, %301 : vector<2x32xf32>
    %303 = math.tanh %302 : vector<2x32xf32>
    %cst_61 = arith.constant 1.000000e+00 : f32
    %304 = vector.broadcast %cst_61 : f32 to vector<2x32xf32>
    %305 = arith.subf %304, %296 : vector<2x32xf32>
    %306 = arith.mulf %305, %303 : vector<2x32xf32>
    %307 = arith.mulf %296, %241 : vector<2x32xf32>
    %308 = arith.addf %306, %307 : vector<2x32xf32>
    %309 = arith.truncf %308 : vector<2x32xf32> to vector<2x32xbf16>
    %cst_62 = arith.constant dense<0.000000e+00> : vector<2x96xf32>
    %310 = tpu.matmul %309, %1, %cst_62 {dimension_numbers = #tpu.dot_dimension_numbers<[1], [0], [0], [1], [0, 0, 1, 1], [], []>} : vector<2x32xbf16>, vector<32x96xbf16>, vector<2x96xf32> -> vector<2x96xf32>
    %311 = vector.broadcast %4 : vector<1x96xf32> to vector<2x96xf32>
    %312 = arith.addf %310, %311 : vector<2x96xf32>
    %313 = arith.truncf %275 : vector<2x32xf32> to vector<2x32xbf16>
    %cst_63 = arith.constant dense<0.000000e+00> : vector<2x96xf32>
    %314 = tpu.matmul %313, %2, %cst_63 {dimension_numbers = #tpu.dot_dimension_numbers<[1], [0], [0], [1], [0, 0, 1, 1], [], []>} : vector<2x32xbf16>, vector<32x96xbf16>, vector<2x96xf32> -> vector<2x96xf32>
    %315 = vector.extract_strided_slice %312 {offsets = [0, 0], sizes = [2, 32], strides = [1, 1]} : vector<2x96xf32> to vector<2x32xf32>
    %316 = vector.extract_strided_slice %314 {offsets = [0, 0], sizes = [2, 32], strides = [1, 1]} : vector<2x96xf32> to vector<2x32xf32>
    %317 = arith.addf %315, %316 : vector<2x32xf32>
    %318 = arith.negf %317 : vector<2x32xf32>
    %319 = math.exp %318 : vector<2x32xf32>
    %cst_64 = arith.constant 1.000000e+00 : f32
    %320 = vector.broadcast %cst_64 : f32 to vector<2x32xf32>
    %321 = arith.addf %320, %319 : vector<2x32xf32>
    %322 = arith.divf %320, %321 : vector<2x32xf32>
    %323 = vector.extract_strided_slice %312 {offsets = [0, 32], sizes = [2, 32], strides = [1, 1]} : vector<2x96xf32> to vector<2x32xf32>
    %324 = vector.extract_strided_slice %314 {offsets = [0, 32], sizes = [2, 32], strides = [1, 1]} : vector<2x96xf32> to vector<2x32xf32>
    %325 = arith.addf %323, %324 : vector<2x32xf32>
    %326 = arith.negf %325 : vector<2x32xf32>
    %327 = math.exp %326 : vector<2x32xf32>
    %cst_65 = arith.constant 1.000000e+00 : f32
    %328 = vector.broadcast %cst_65 : f32 to vector<2x32xf32>
    %329 = arith.addf %328, %327 : vector<2x32xf32>
    %330 = arith.divf %328, %329 : vector<2x32xf32>
    %331 = vector.extract_strided_slice %312 {offsets = [0, 64], sizes = [2, 32], strides = [1, 1]} : vector<2x96xf32> to vector<2x32xf32>
    %332 = vector.extract_strided_slice %314 {offsets = [0, 64], sizes = [2, 32], strides = [1, 1]} : vector<2x96xf32> to vector<2x32xf32>
    %333 = vector.broadcast %5 : vector<1x32xf32> to vector<2x32xf32>
    %334 = arith.addf %332, %333 : vector<2x32xf32>
    %335 = arith.mulf %322, %334 : vector<2x32xf32>
    %336 = arith.addf %331, %335 : vector<2x32xf32>
    %337 = math.tanh %336 : vector<2x32xf32>
    %cst_66 = arith.constant 1.000000e+00 : f32
    %338 = vector.broadcast %cst_66 : f32 to vector<2x32xf32>
    %339 = arith.subf %338, %330 : vector<2x32xf32>
    %340 = arith.mulf %339, %337 : vector<2x32xf32>
    %341 = arith.mulf %330, %275 : vector<2x32xf32>
    %342 = arith.addf %340, %341 : vector<2x32xf32>
    %c5_i32 = arith.constant 5 : i32
    %343 = arith.index_cast %c5_i32 : i32 to index
    %c0_67 = arith.constant 0 : index
    %c0_68 = arith.constant 0 : index
    %344 = vector.load %arg0[%343, %c0_67, %c0_68] : memref<8x2x96xf32, #tpu.memory_space<vmem>>, vector<1x2x96xf32>
    %345 = vector.shape_cast %344 : vector<1x2x96xf32> to vector<2x96xf32>
    %346 = arith.truncf %308 : vector<2x32xf32> to vector<2x32xbf16>
    %cst_69 = arith.constant dense<0.000000e+00> : vector<2x96xf32>
    %347 = tpu.matmul %346, %0, %cst_69 {dimension_numbers = #tpu.dot_dimension_numbers<[1], [0], [0], [1], [0, 0, 1, 1], [], []>} : vector<2x32xbf16>, vector<32x96xbf16>, vector<2x96xf32> -> vector<2x96xf32>
    %348 = vector.extract_strided_slice %345 {offsets = [0, 0], sizes = [2, 32], strides = [1, 1]} : vector<2x96xf32> to vector<2x32xf32>
    %349 = vector.extract_strided_slice %347 {offsets = [0, 0], sizes = [2, 32], strides = [1, 1]} : vector<2x96xf32> to vector<2x32xf32>
    %350 = arith.addf %348, %349 : vector<2x32xf32>
    %351 = arith.negf %350 : vector<2x32xf32>
    %352 = math.exp %351 : vector<2x32xf32>
    %cst_70 = arith.constant 1.000000e+00 : f32
    %353 = vector.broadcast %cst_70 : f32 to vector<2x32xf32>
    %354 = arith.addf %353, %352 : vector<2x32xf32>
    %355 = arith.divf %353, %354 : vector<2x32xf32>
    %356 = vector.extract_strided_slice %345 {offsets = [0, 32], sizes = [2, 32], strides = [1, 1]} : vector<2x96xf32> to vector<2x32xf32>
    %357 = vector.extract_strided_slice %347 {offsets = [0, 32], sizes = [2, 32], strides = [1, 1]} : vector<2x96xf32> to vector<2x32xf32>
    %358 = arith.addf %356, %357 : vector<2x32xf32>
    %359 = arith.negf %358 : vector<2x32xf32>
    %360 = math.exp %359 : vector<2x32xf32>
    %cst_71 = arith.constant 1.000000e+00 : f32
    %361 = vector.broadcast %cst_71 : f32 to vector<2x32xf32>
    %362 = arith.addf %361, %360 : vector<2x32xf32>
    %363 = arith.divf %361, %362 : vector<2x32xf32>
    %364 = vector.extract_strided_slice %345 {offsets = [0, 64], sizes = [2, 32], strides = [1, 1]} : vector<2x96xf32> to vector<2x32xf32>
    %365 = vector.extract_strided_slice %347 {offsets = [0, 64], sizes = [2, 32], strides = [1, 1]} : vector<2x96xf32> to vector<2x32xf32>
    %366 = vector.broadcast %3 : vector<1x32xf32> to vector<2x32xf32>
    %367 = arith.addf %365, %366 : vector<2x32xf32>
    %368 = arith.mulf %355, %367 : vector<2x32xf32>
    %369 = arith.addf %364, %368 : vector<2x32xf32>
    %370 = math.tanh %369 : vector<2x32xf32>
    %cst_72 = arith.constant 1.000000e+00 : f32
    %371 = vector.broadcast %cst_72 : f32 to vector<2x32xf32>
    %372 = arith.subf %371, %363 : vector<2x32xf32>
    %373 = arith.mulf %372, %370 : vector<2x32xf32>
    %374 = arith.mulf %363, %308 : vector<2x32xf32>
    %375 = arith.addf %373, %374 : vector<2x32xf32>
    %376 = arith.truncf %375 : vector<2x32xf32> to vector<2x32xbf16>
    %cst_73 = arith.constant dense<0.000000e+00> : vector<2x96xf32>
    %377 = tpu.matmul %376, %1, %cst_73 {dimension_numbers = #tpu.dot_dimension_numbers<[1], [0], [0], [1], [0, 0, 1, 1], [], []>} : vector<2x32xbf16>, vector<32x96xbf16>, vector<2x96xf32> -> vector<2x96xf32>
    %378 = vector.broadcast %4 : vector<1x96xf32> to vector<2x96xf32>
    %379 = arith.addf %377, %378 : vector<2x96xf32>
    %380 = arith.truncf %342 : vector<2x32xf32> to vector<2x32xbf16>
    %cst_74 = arith.constant dense<0.000000e+00> : vector<2x96xf32>
    %381 = tpu.matmul %380, %2, %cst_74 {dimension_numbers = #tpu.dot_dimension_numbers<[1], [0], [0], [1], [0, 0, 1, 1], [], []>} : vector<2x32xbf16>, vector<32x96xbf16>, vector<2x96xf32> -> vector<2x96xf32>
    %382 = vector.extract_strided_slice %379 {offsets = [0, 0], sizes = [2, 32], strides = [1, 1]} : vector<2x96xf32> to vector<2x32xf32>
    %383 = vector.extract_strided_slice %381 {offsets = [0, 0], sizes = [2, 32], strides = [1, 1]} : vector<2x96xf32> to vector<2x32xf32>
    %384 = arith.addf %382, %383 : vector<2x32xf32>
    %385 = arith.negf %384 : vector<2x32xf32>
    %386 = math.exp %385 : vector<2x32xf32>
    %cst_75 = arith.constant 1.000000e+00 : f32
    %387 = vector.broadcast %cst_75 : f32 to vector<2x32xf32>
    %388 = arith.addf %387, %386 : vector<2x32xf32>
    %389 = arith.divf %387, %388 : vector<2x32xf32>
    %390 = vector.extract_strided_slice %379 {offsets = [0, 32], sizes = [2, 32], strides = [1, 1]} : vector<2x96xf32> to vector<2x32xf32>
    %391 = vector.extract_strided_slice %381 {offsets = [0, 32], sizes = [2, 32], strides = [1, 1]} : vector<2x96xf32> to vector<2x32xf32>
    %392 = arith.addf %390, %391 : vector<2x32xf32>
    %393 = arith.negf %392 : vector<2x32xf32>
    %394 = math.exp %393 : vector<2x32xf32>
    %cst_76 = arith.constant 1.000000e+00 : f32
    %395 = vector.broadcast %cst_76 : f32 to vector<2x32xf32>
    %396 = arith.addf %395, %394 : vector<2x32xf32>
    %397 = arith.divf %395, %396 : vector<2x32xf32>
    %398 = vector.extract_strided_slice %379 {offsets = [0, 64], sizes = [2, 32], strides = [1, 1]} : vector<2x96xf32> to vector<2x32xf32>
    %399 = vector.extract_strided_slice %381 {offsets = [0, 64], sizes = [2, 32], strides = [1, 1]} : vector<2x96xf32> to vector<2x32xf32>
    %400 = vector.broadcast %5 : vector<1x32xf32> to vector<2x32xf32>
    %401 = arith.addf %399, %400 : vector<2x32xf32>
    %402 = arith.mulf %389, %401 : vector<2x32xf32>
    %403 = arith.addf %398, %402 : vector<2x32xf32>
    %404 = math.tanh %403 : vector<2x32xf32>
    %cst_77 = arith.constant 1.000000e+00 : f32
    %405 = vector.broadcast %cst_77 : f32 to vector<2x32xf32>
    %406 = arith.subf %405, %397 : vector<2x32xf32>
    %407 = arith.mulf %406, %404 : vector<2x32xf32>
    %408 = arith.mulf %397, %342 : vector<2x32xf32>
    %409 = arith.addf %407, %408 : vector<2x32xf32>
    %c6_i32 = arith.constant 6 : i32
    %410 = arith.index_cast %c6_i32 : i32 to index
    %c0_78 = arith.constant 0 : index
    %c0_79 = arith.constant 0 : index
    %411 = vector.load %arg0[%410, %c0_78, %c0_79] : memref<8x2x96xf32, #tpu.memory_space<vmem>>, vector<1x2x96xf32>
    %412 = vector.shape_cast %411 : vector<1x2x96xf32> to vector<2x96xf32>
    %413 = arith.truncf %375 : vector<2x32xf32> to vector<2x32xbf16>
    %cst_80 = arith.constant dense<0.000000e+00> : vector<2x96xf32>
    %414 = tpu.matmul %413, %0, %cst_80 {dimension_numbers = #tpu.dot_dimension_numbers<[1], [0], [0], [1], [0, 0, 1, 1], [], []>} : vector<2x32xbf16>, vector<32x96xbf16>, vector<2x96xf32> -> vector<2x96xf32>
    %415 = vector.extract_strided_slice %412 {offsets = [0, 0], sizes = [2, 32], strides = [1, 1]} : vector<2x96xf32> to vector<2x32xf32>
    %416 = vector.extract_strided_slice %414 {offsets = [0, 0], sizes = [2, 32], strides = [1, 1]} : vector<2x96xf32> to vector<2x32xf32>
    %417 = arith.addf %415, %416 : vector<2x32xf32>
    %418 = arith.negf %417 : vector<2x32xf32>
    %419 = math.exp %418 : vector<2x32xf32>
    %cst_81 = arith.constant 1.000000e+00 : f32
    %420 = vector.broadcast %cst_81 : f32 to vector<2x32xf32>
    %421 = arith.addf %420, %419 : vector<2x32xf32>
    %422 = arith.divf %420, %421 : vector<2x32xf32>
    %423 = vector.extract_strided_slice %412 {offsets = [0, 32], sizes = [2, 32], strides = [1, 1]} : vector<2x96xf32> to vector<2x32xf32>
    %424 = vector.extract_strided_slice %414 {offsets = [0, 32], sizes = [2, 32], strides = [1, 1]} : vector<2x96xf32> to vector<2x32xf32>
    %425 = arith.addf %423, %424 : vector<2x32xf32>
    %426 = arith.negf %425 : vector<2x32xf32>
    %427 = math.exp %426 : vector<2x32xf32>
    %cst_82 = arith.constant 1.000000e+00 : f32
    %428 = vector.broadcast %cst_82 : f32 to vector<2x32xf32>
    %429 = arith.addf %428, %427 : vector<2x32xf32>
    %430 = arith.divf %428, %429 : vector<2x32xf32>
    %431 = vector.extract_strided_slice %412 {offsets = [0, 64], sizes = [2, 32], strides = [1, 1]} : vector<2x96xf32> to vector<2x32xf32>
    %432 = vector.extract_strided_slice %414 {offsets = [0, 64], sizes = [2, 32], strides = [1, 1]} : vector<2x96xf32> to vector<2x32xf32>
    %433 = vector.broadcast %3 : vector<1x32xf32> to vector<2x32xf32>
    %434 = arith.addf %432, %433 : vector<2x32xf32>
    %435 = arith.mulf %422, %434 : vector<2x32xf32>
    %436 = arith.addf %431, %435 : vector<2x32xf32>
    %437 = math.tanh %436 : vector<2x32xf32>
    %cst_83 = arith.constant 1.000000e+00 : f32
    %438 = vector.broadcast %cst_83 : f32 to vector<2x32xf32>
    %439 = arith.subf %438, %430 : vector<2x32xf32>
    %440 = arith.mulf %439, %437 : vector<2x32xf32>
    %441 = arith.mulf %430, %375 : vector<2x32xf32>
    %442 = arith.addf %440, %441 : vector<2x32xf32>
    %443 = arith.truncf %442 : vector<2x32xf32> to vector<2x32xbf16>
    %cst_84 = arith.constant dense<0.000000e+00> : vector<2x96xf32>
    %444 = tpu.matmul %443, %1, %cst_84 {dimension_numbers = #tpu.dot_dimension_numbers<[1], [0], [0], [1], [0, 0, 1, 1], [], []>} : vector<2x32xbf16>, vector<32x96xbf16>, vector<2x96xf32> -> vector<2x96xf32>
    %445 = vector.broadcast %4 : vector<1x96xf32> to vector<2x96xf32>
    %446 = arith.addf %444, %445 : vector<2x96xf32>
    %447 = arith.truncf %409 : vector<2x32xf32> to vector<2x32xbf16>
    %cst_85 = arith.constant dense<0.000000e+00> : vector<2x96xf32>
    %448 = tpu.matmul %447, %2, %cst_85 {dimension_numbers = #tpu.dot_dimension_numbers<[1], [0], [0], [1], [0, 0, 1, 1], [], []>} : vector<2x32xbf16>, vector<32x96xbf16>, vector<2x96xf32> -> vector<2x96xf32>
    %449 = vector.extract_strided_slice %446 {offsets = [0, 0], sizes = [2, 32], strides = [1, 1]} : vector<2x96xf32> to vector<2x32xf32>
    %450 = vector.extract_strided_slice %448 {offsets = [0, 0], sizes = [2, 32], strides = [1, 1]} : vector<2x96xf32> to vector<2x32xf32>
    %451 = arith.addf %449, %450 : vector<2x32xf32>
    %452 = arith.negf %451 : vector<2x32xf32>
    %453 = math.exp %452 : vector<2x32xf32>
    %cst_86 = arith.constant 1.000000e+00 : f32
    %454 = vector.broadcast %cst_86 : f32 to vector<2x32xf32>
    %455 = arith.addf %454, %453 : vector<2x32xf32>
    %456 = arith.divf %454, %455 : vector<2x32xf32>
    %457 = vector.extract_strided_slice %446 {offsets = [0, 32], sizes = [2, 32], strides = [1, 1]} : vector<2x96xf32> to vector<2x32xf32>
    %458 = vector.extract_strided_slice %448 {offsets = [0, 32], sizes = [2, 32], strides = [1, 1]} : vector<2x96xf32> to vector<2x32xf32>
    %459 = arith.addf %457, %458 : vector<2x32xf32>
    %460 = arith.negf %459 : vector<2x32xf32>
    %461 = math.exp %460 : vector<2x32xf32>
    %cst_87 = arith.constant 1.000000e+00 : f32
    %462 = vector.broadcast %cst_87 : f32 to vector<2x32xf32>
    %463 = arith.addf %462, %461 : vector<2x32xf32>
    %464 = arith.divf %462, %463 : vector<2x32xf32>
    %465 = vector.extract_strided_slice %446 {offsets = [0, 64], sizes = [2, 32], strides = [1, 1]} : vector<2x96xf32> to vector<2x32xf32>
    %466 = vector.extract_strided_slice %448 {offsets = [0, 64], sizes = [2, 32], strides = [1, 1]} : vector<2x96xf32> to vector<2x32xf32>
    %467 = vector.broadcast %5 : vector<1x32xf32> to vector<2x32xf32>
    %468 = arith.addf %466, %467 : vector<2x32xf32>
    %469 = arith.mulf %456, %468 : vector<2x32xf32>
    %470 = arith.addf %465, %469 : vector<2x32xf32>
    %471 = math.tanh %470 : vector<2x32xf32>
    %cst_88 = arith.constant 1.000000e+00 : f32
    %472 = vector.broadcast %cst_88 : f32 to vector<2x32xf32>
    %473 = arith.subf %472, %464 : vector<2x32xf32>
    %474 = arith.mulf %473, %471 : vector<2x32xf32>
    %475 = arith.mulf %464, %409 : vector<2x32xf32>
    %476 = arith.addf %474, %475 : vector<2x32xf32>
    %c7_i32 = arith.constant 7 : i32
    %477 = arith.index_cast %c7_i32 : i32 to index
    %c0_89 = arith.constant 0 : index
    %c0_90 = arith.constant 0 : index
    %478 = vector.load %arg0[%477, %c0_89, %c0_90] : memref<8x2x96xf32, #tpu.memory_space<vmem>>, vector<1x2x96xf32>
    %479 = vector.shape_cast %478 : vector<1x2x96xf32> to vector<2x96xf32>
    %480 = arith.truncf %442 : vector<2x32xf32> to vector<2x32xbf16>
    %cst_91 = arith.constant dense<0.000000e+00> : vector<2x96xf32>
    %481 = tpu.matmul %480, %0, %cst_91 {dimension_numbers = #tpu.dot_dimension_numbers<[1], [0], [0], [1], [0, 0, 1, 1], [], []>} : vector<2x32xbf16>, vector<32x96xbf16>, vector<2x96xf32> -> vector<2x96xf32>
    %482 = vector.extract_strided_slice %479 {offsets = [0, 0], sizes = [2, 32], strides = [1, 1]} : vector<2x96xf32> to vector<2x32xf32>
    %483 = vector.extract_strided_slice %481 {offsets = [0, 0], sizes = [2, 32], strides = [1, 1]} : vector<2x96xf32> to vector<2x32xf32>
    %484 = arith.addf %482, %483 : vector<2x32xf32>
    %485 = arith.negf %484 : vector<2x32xf32>
    %486 = math.exp %485 : vector<2x32xf32>
    %cst_92 = arith.constant 1.000000e+00 : f32
    %487 = vector.broadcast %cst_92 : f32 to vector<2x32xf32>
    %488 = arith.addf %487, %486 : vector<2x32xf32>
    %489 = arith.divf %487, %488 : vector<2x32xf32>
    %490 = vector.extract_strided_slice %479 {offsets = [0, 32], sizes = [2, 32], strides = [1, 1]} : vector<2x96xf32> to vector<2x32xf32>
    %491 = vector.extract_strided_slice %481 {offsets = [0, 32], sizes = [2, 32], strides = [1, 1]} : vector<2x96xf32> to vector<2x32xf32>
    %492 = arith.addf %490, %491 : vector<2x32xf32>
    %493 = arith.negf %492 : vector<2x32xf32>
    %494 = math.exp %493 : vector<2x32xf32>
    %cst_93 = arith.constant 1.000000e+00 : f32
    %495 = vector.broadcast %cst_93 : f32 to vector<2x32xf32>
    %496 = arith.addf %495, %494 : vector<2x32xf32>
    %497 = arith.divf %495, %496 : vector<2x32xf32>
    %498 = vector.extract_strided_slice %479 {offsets = [0, 64], sizes = [2, 32], strides = [1, 1]} : vector<2x96xf32> to vector<2x32xf32>
    %499 = vector.extract_strided_slice %481 {offsets = [0, 64], sizes = [2, 32], strides = [1, 1]} : vector<2x96xf32> to vector<2x32xf32>
    %500 = vector.broadcast %3 : vector<1x32xf32> to vector<2x32xf32>
    %501 = arith.addf %499, %500 : vector<2x32xf32>
    %502 = arith.mulf %489, %501 : vector<2x32xf32>
    %503 = arith.addf %498, %502 : vector<2x32xf32>
    %504 = math.tanh %503 : vector<2x32xf32>
    %cst_94 = arith.constant 1.000000e+00 : f32
    %505 = vector.broadcast %cst_94 : f32 to vector<2x32xf32>
    %506 = arith.subf %505, %497 : vector<2x32xf32>
    %507 = arith.mulf %506, %504 : vector<2x32xf32>
    %508 = arith.mulf %497, %442 : vector<2x32xf32>
    %509 = arith.addf %507, %508 : vector<2x32xf32>
    %510 = arith.truncf %509 : vector<2x32xf32> to vector<2x32xbf16>
    %cst_95 = arith.constant dense<0.000000e+00> : vector<2x96xf32>
    %511 = tpu.matmul %510, %1, %cst_95 {dimension_numbers = #tpu.dot_dimension_numbers<[1], [0], [0], [1], [0, 0, 1, 1], [], []>} : vector<2x32xbf16>, vector<32x96xbf16>, vector<2x96xf32> -> vector<2x96xf32>
    %512 = vector.broadcast %4 : vector<1x96xf32> to vector<2x96xf32>
    %513 = arith.addf %511, %512 : vector<2x96xf32>
    %514 = arith.truncf %476 : vector<2x32xf32> to vector<2x32xbf16>
    %cst_96 = arith.constant dense<0.000000e+00> : vector<2x96xf32>
    %515 = tpu.matmul %514, %2, %cst_96 {dimension_numbers = #tpu.dot_dimension_numbers<[1], [0], [0], [1], [0, 0, 1, 1], [], []>} : vector<2x32xbf16>, vector<32x96xbf16>, vector<2x96xf32> -> vector<2x96xf32>
    %516 = vector.extract_strided_slice %513 {offsets = [0, 0], sizes = [2, 32], strides = [1, 1]} : vector<2x96xf32> to vector<2x32xf32>
    %517 = vector.extract_strided_slice %515 {offsets = [0, 0], sizes = [2, 32], strides = [1, 1]} : vector<2x96xf32> to vector<2x32xf32>
    %518 = arith.addf %516, %517 : vector<2x32xf32>
    %519 = arith.negf %518 : vector<2x32xf32>
    %520 = math.exp %519 : vector<2x32xf32>
    %cst_97 = arith.constant 1.000000e+00 : f32
    %521 = vector.broadcast %cst_97 : f32 to vector<2x32xf32>
    %522 = arith.addf %521, %520 : vector<2x32xf32>
    %523 = arith.divf %521, %522 : vector<2x32xf32>
    %524 = vector.extract_strided_slice %513 {offsets = [0, 32], sizes = [2, 32], strides = [1, 1]} : vector<2x96xf32> to vector<2x32xf32>
    %525 = vector.extract_strided_slice %515 {offsets = [0, 32], sizes = [2, 32], strides = [1, 1]} : vector<2x96xf32> to vector<2x32xf32>
    %526 = arith.addf %524, %525 : vector<2x32xf32>
    %527 = arith.negf %526 : vector<2x32xf32>
    %528 = math.exp %527 : vector<2x32xf32>
    %cst_98 = arith.constant 1.000000e+00 : f32
    %529 = vector.broadcast %cst_98 : f32 to vector<2x32xf32>
    %530 = arith.addf %529, %528 : vector<2x32xf32>
    %531 = arith.divf %529, %530 : vector<2x32xf32>
    %532 = vector.extract_strided_slice %513 {offsets = [0, 64], sizes = [2, 32], strides = [1, 1]} : vector<2x96xf32> to vector<2x32xf32>
    %533 = vector.extract_strided_slice %515 {offsets = [0, 64], sizes = [2, 32], strides = [1, 1]} : vector<2x96xf32> to vector<2x32xf32>
    %534 = vector.broadcast %5 : vector<1x32xf32> to vector<2x32xf32>
    %535 = arith.addf %533, %534 : vector<2x32xf32>
    %536 = arith.mulf %523, %535 : vector<2x32xf32>
    %537 = arith.addf %532, %536 : vector<2x32xf32>
    %538 = math.tanh %537 : vector<2x32xf32>
    %cst_99 = arith.constant 1.000000e+00 : f32
    %539 = vector.broadcast %cst_99 : f32 to vector<2x32xf32>
    %540 = arith.subf %539, %531 : vector<2x32xf32>
    %541 = arith.mulf %540, %538 : vector<2x32xf32>
    %542 = arith.mulf %531, %476 : vector<2x32xf32>
    %543 = arith.addf %541, %542 : vector<2x32xf32>
    %c8_i32 = arith.constant 8 : i32
    %c0_100 = arith.constant 0 : index
    %c0_101 = arith.constant 0 : index
    %544 = vector.load %arg7[%c0_100, %c0_101] : memref<2x32xf32, #tpu.memory_space<vmem>>, vector<2x32xf32>
    tpu.vector_store %arg7[%c0_100, %c0_101], %509 {strides = array<i32>} : memref<2x32xf32, #tpu.memory_space<vmem>>, vector<2x32xf32>,
    %c0_102 = arith.constant 0 : index
    %c0_103 = arith.constant 0 : index
    %545 = vector.load %arg8[%c0_102, %c0_103] : memref<2x32xf32, #tpu.memory_space<vmem>>, vector<2x32xf32>
    tpu.vector_store %arg8[%c0_102, %c0_103], %543 {strides = array<i32>} : memref<2x32xf32, #tpu.memory_space<vmem>>, vector<2x32xf32>,
    return
  }
}

</mosaic_0001>

<llo_original>
// kernel: encoder_forward.1
$region0: #{encoder_forward.1}
  #allocation0 [shape = 'u32[]', space=smem, size = 0x4, offset = 0x4, fixed_abs, tag = 'smem constant byte address 0x4 - core index']
  #allocation1 [shape = 'u32[144,128]{1,0:T(1,128)}', space=vmem, size = 0x12000, scoped, tag = 'internal scratch']
  %s0 = inlined_call_operand.vmem [shape: f32[8,2,96], index: 0, kind: input, shape index: {}]
  %s1 = inlined_call_operand.vmem [shape: bf16[32,96], index: 1, kind: input, shape index: {}]
  %s2 = inlined_call_operand.vmem [shape: f32[1,32], index: 2, kind: input, shape index: {}]
  %s3 = inlined_call_operand.vmem [shape: bf16[32,96], index: 3, kind: input, shape index: {}]
  %s4 = inlined_call_operand.vmem [shape: f32[1,96], index: 4, kind: input, shape index: {}]
  %s5 = inlined_call_operand.vmem [shape: bf16[32,96], index: 5, kind: input, shape index: {}]
  %s6 = inlined_call_operand.vmem [shape: f32[1,32], index: 6, kind: input, shape index: {}]
  %s7 = inlined_call_operand.hbm [shape: f32[2,32], index: 7, kind: output, shape index: {0}]
  %s8 = inlined_call_operand.hbm [shape: f32[2,32], index: 8, kind: output, shape index: {1}]
  %9 = xla_tuple %s7, %s8
  %s10 = sld [smem:[#allocation0]]
  $region46: #{encoder_forward.1} parent=0
    _
  %s12 = ssub.s32 1, %s10
  %s13 = scalar_select 0, %s12, %s10
  $region1: #{encoder_forward.1} parent=0
    #allocation2 [shape = 'u8[1024]{0}', space=vmem, size = 0x400, scoped, tag = 'output window, operand 0, single buffered']
    #allocation3 [shape = 's32[1]{0}', space=sflag, size = 0x4, scoped, tag = 'scoped memory for encoder_forward.1']
    #allocation4 [shape = 'u8[1024]{0}', space=vmem, size = 0x400, scoped, tag = 'output window, operand 1, single buffered']
    #allocation5 [shape = 's32[1]{0}', space=sflag, size = 0x4, scoped, tag = 'scoped memory for encoder_forward.1']
    %14 = vsyncpa [#allocation3], 0
    %15 = vsyncpa [#allocation5], 0
    // Predicated region
    $region2: #{encoder_forward.1} parent=1 // pred_check
      _
    $region3: #{encoder_forward.1} parent=1 // pred_check_branch
      %17 = sbr.rel (0) target = $region5
    $region4: #{encoder_forward.1} parent=1 // pred_region
      _
    $region5: #{encoder_forward.1} parent=1 // pred_fallthru
      _
    // Predicated region
    $region6: #{encoder_forward.1} parent=1 // pred_check
      _
    $region7: #{encoder_forward.1} parent=1 // pred_check_branch
      %19 = sbr.rel (0) target = $region9
    $region8: #{encoder_forward.1} parent=1 // pred_region
      _
    $region9: #{encoder_forward.1} parent=1 // pred_fallthru
      _
    // Predicated region
    $region10: #{encoder_forward.1} parent=1 // pred_check
      _
    $region11: #{encoder_forward.1} parent=1 // pred_check_branch
      %21 = sbr.rel (0) target = $region13
    $region12: #{encoder_forward.1} parent=1 // pred_region
      _
    $region13: #{encoder_forward.1} parent=1 // pred_fallthru
      _
    // Predicated region
    $region14: #{encoder_forward.1} parent=1 // pred_check
      _
    $region15: #{encoder_forward.1} parent=1 // pred_check_branch
      %23 = sbr.rel (0) target = $region17
    $region16: #{encoder_forward.1} parent=1 // pred_region
      _
    $region17: #{encoder_forward.1} parent=1 // pred_fallthru
      _
    // Predicated region
    $region18: #{encoder_forward.1} parent=1 // pred_check
      _
    $region19: #{encoder_forward.1} parent=1 // pred_check_branch
      %25 = sbr.rel (0) target = $region21
    $region20: #{encoder_forward.1} parent=1 // pred_region
      _
    $region21: #{encoder_forward.1} parent=1 // pred_fallthru
      _
    // Predicated region
    $region22: #{encoder_forward.1} parent=1 // pred_check
      _
    $region23: #{encoder_forward.1} parent=1 // pred_check_branch
      %27 = sbr.rel (0) target = $region25
    $region24: #{encoder_forward.1} parent=1 // pred_region
      _
    $region25: #{encoder_forward.1} parent=1 // pred_fallthru
      _
    // Predicated region
    $region26: #{encoder_forward.1} parent=1 // pred_check
      _
    $region27: #{encoder_forward.1} parent=1 // pred_check_branch
      %29 = sbr.rel (0) target = $region29
    $region28: #{encoder_forward.1} parent=1 // pred_region
      _
    $region29: #{encoder_forward.1} parent=1 // pred_fallthru
      _
    %v31 = vld [vmem:[%s1] sm:$0xf]
    %v32 = vld [vmem:[%s1 + $0x4] sm:$0xf]
    %v33 = vld [vmem:[%s1 + $0x8] sm:$0xf]
    %v34 = vld [vmem:[%s1 + $0xc] sm:$0xf]
    %v35 = vld [vmem:[%s3] sm:$0xf]
    %v36 = vld [vmem:[%s3 + $0x4] sm:$0xf]
    %v37 = vld [vmem:[%s3 + $0x8] sm:$0xf]
    %v38 = vld [vmem:[%s3 + $0xc] sm:$0xf]
    %v39 = vld [vmem:[%s5] sm:$0xf]
    %v40 = vld [vmem:[%s5 + $0x4] sm:$0xf]
    %v41 = vld [vmem:[%s5 + $0x8] sm:$0xf]
    %v42 = vld [vmem:[%s5 + $0xc] sm:$0xf]
    %v43 = vld [vmem:[%s2] sm:$0x1]
    %v44 = vld [vmem:[%s4] sm:$0x1]
    %v45 = vld [vmem:[%s6] sm:$0x1]
    %v46 = vld [vmem:[%s0] sm:$0x3]
    %v51 = vunpack.c.l.b16 %v31
    %v52 = vunpack.c.l.b16 %v32
    %v53 = vunpack.c.l.b16 %v33
    %v54 = vunpack.c.l.b16 %v34
    %v55 = vpack.c.b16 %v52, %v51
    %v56 = vpack.c.b16 %v54, %v53
    %vm59 = vcmask 261120
    %v61 = vsel %vm59, 0, 0
    %63 = vmatprep.subr.bf16.mxu0 0
    %64 = vmatpush1.bf16.msra.mxu0 %v55
    %65 = vmatprep.subr.bf16.mxu0 0
    %66 = vmatpush1.bf16.msra.mxu0 %v56
    %67 = vmatprep.subr.bf16.mxu0 0
    %68 = vmatpush1.bf16.msra.mxu0 0
    %69 = vmatprep.subr.bf16.mxu0 0
    %70 = vmatpush1.bf16.msra.mxu0 0
    %71 = vmatprep.subr.bf16.mxu0 0
    %72 = vmatpush1.bf16.msra.mxu0 0
    %73 = vmatprep.subr.bf16.mxu0 0
    %74 = vmatpush1.bf16.msra.mxu0 0
    %75 = vmatprep.subr.bf16.mxu0 0
    %76 = vmatpush1.bf16.msra.mxu0 0
    %77 = vmatprep.subr.bf16.mxu0 0
    %78 = vmatpush1.bf16.msra.mxu0 0
    %79 = vmatprep.subr.bf16.mxu0 0
    %80 = vmatpush1.bf16.msra.mxu0 0
    %81 = vmatprep.subr.bf16.mxu0 0
    %82 = vmatpush1.bf16.msra.mxu0 0
    %83 = vmatprep.subr.bf16.mxu0 0
    %84 = vmatpush1.bf16.msra.mxu0 0
    %85 = vmatprep.subr.bf16.mxu0 0
    %86 = vmatpush1.bf16.msra.mxu0 0
    %87 = vmatprep.subr.bf16.mxu0 0
    %88 = vmatpush1.bf16.msra.mxu0 0
    %89 = vmatprep.subr.bf16.mxu0 0
    %90 = vmatpush1.bf16.msra.mxu0 0
    %91 = vmatprep.subr.bf16.mxu0 0
    %92 = vmatpush1.bf16.msra.mxu0 0
    %93 = vmatprep.subr.bf16.mxu0 0
    %94 = vmatpush1.bf16.msra.mxu0 0
    %95 = vmatprep.mubr.bf16.mxu0 0
    %96 = vmatmul.mubr.bf16.gmra.mrb[0].mxu0 %v61
    %v97 = vpop.f32.mrb[0].mxu0
    %v98 = vadd.f32 0.0, %v97
    %v99 = vpop.f32.mrb[0].mxu0
    %v100 = vpop.f32.mrb[0].mxu0
    %v101 = vpop.f32.mrb[0].mxu0
    %102 = vdwg.mxu0
    %v103 = vadd.f32 %v46, %v98
    %v104 = vxor.u32 %v103, 2147483648
    %v105 = vmul.f32 %v104, 1.442695
    %v106 = vpow.pop %v105
    %v107 = vadd.f32 %v106, 1.0
    %v108 = vrcp.pop %v107
    %v109 = vmul.f32 1.0, %v108
    %v111 = vlaneseq
    %v112 = vshrl.u32 %v111, 7
    %v113 = vsub.s32 0, %v112
    %v114 = vrot.slane %v43, %v113
    %115 = vrot.lane.b32.xlu0 %v114, 64
    %v116 = vpop.permute.xlu0 %115
    %v118 = vadd.f32 %v98, %v116
    %120 = vrot.lane.b32.xlu0 %v118, 64
    %v121 = vpop.permute.xlu0 %120
    %v123 = vmul.f32 %v109, %v121
    %125 = vrot.lane.b32.xlu0 %v123, 64
    %v126 = vpop.permute.xlu0 %125
    %v128 = vadd.f32 %v46, %v126
    %v129 = vtanh.pop %v128
    %v130 = vsub.f32 1.0, %v109
    %132 = vrot.lane.b32.xlu0 %v129, 96
    %v133 = vpop.permute.xlu0 %132
    %v135 = vmul.f32 %v130, %v133
    %v136 = vmul.f32 %v109, 0.0
    %v137 = vadd.f32 %v135, %v136
    %v138 = vpack.c.bf16 %v137, %v137
    %v140 = vlaneseq
    %v141 = vshrl.u32 %v140, 7
    %v142 = vsub.s32 0, %v141
    %v143 = vrot.slane %v44, %v142
    %146 = vrot.lane.b32.xlu0 %v138, 96
    %v147 = vpop.permute.xlu0 %146
    %v152 = vunpack.c.l.b16 %v35
    %v153 = vunpack.c.l.b16 %v36
    %v154 = vunpack.c.l.b16 %v37
    %v155 = vunpack.c.l.b16 %v38
    %v156 = vpack.c.b16 %v153, %v152
    %v157 = vpack.c.b16 %v155, %v154
    %v161 = vsel %vm59, %v147, 0
    %163 = vmatprep.subr.bf16.mxu0 0
    %164 = vmatpush1.bf16.msra.mxu0 %v156
    %165 = vmatprep.subr.bf16.mxu0 0
    %166 = vmatpush1.bf16.msra.mxu0 %v157
    %167 = vmatprep.subr.bf16.mxu0 0
    %168 = vmatpush1.bf16.msra.mxu0 0
    %169 = vmatprep.subr.bf16.mxu0 0
    %170 = vmatpush1.bf16.msra.mxu0 0
    %171 = vmatprep.subr.bf16.mxu0 0
    %172 = vmatpush1.bf16.msra.mxu0 0
    %173 = vmatprep.subr.bf16.mxu0 0
    %174 = vmatpush1.bf16.msra.mxu0 0
    %175 = vmatprep.subr.bf16.mxu0 0
    %176 = vmatpush1.bf16.msra.mxu0 0
    %177 = vmatprep.subr.bf16.mxu0 0
    %178 = vmatpush1.bf16.msra.mxu0 0
    %179 = vmatprep.subr.bf16.mxu0 0
    %180 = vmatpush1.bf16.msra.mxu0 0
    %181 = vmatprep.subr.bf16.mxu0 0
    %182 = vmatpush1.bf16.msra.mxu0 0
    %183 = vmatprep.subr.bf16.mxu0 0
    %184 = vmatpush1.bf16.msra.mxu0 0
    %185 = vmatprep.subr.bf16.mxu0 0
    %186 = vmatpush1.bf16.msra.mxu0 0
    %187 = vmatprep.subr.bf16.mxu0 0
    %188 = vmatpush1.bf16.msra.mxu0 0
    %189 = vmatprep.subr.bf16.mxu0 0
    %190 = vmatpush1.bf16.msra.mxu0 0
    %191 = vmatprep.subr.bf16.mxu0 0
    %192 = vmatpush1.bf16.msra.mxu0 0
    %193 = vmatprep.subr.bf16.mxu0 0
    %194 = vmatpush1.bf16.msra.mxu0 0
    %195 = vmatprep.mubr.bf16.mxu0 0
    %196 = vmatmul.mubr.bf16.gmra.mrb[0].mxu0 %v161
    %v197 = vpop.f32.mrb[0].mxu0
    %v198 = vadd.f32 %v143, %v197
    %v199 = vpop.f32.mrb[0].mxu0
    %v200 = vpop.f32.mrb[0].mxu0
    %v201 = vpop.f32.mrb[0].mxu0
    %202 = vdwg.mxu0
    %v207 = vunpack.c.l.b16 %v39
    %v208 = vunpack.c.l.b16 %v40
    %v209 = vunpack.c.l.b16 %v41
    %v210 = vunpack.c.l.b16 %v42
    %v211 = vpack.c.b16 %v208, %v207
    %v212 = vpack.c.b16 %v210, %v209
    %215 = vmatprep.subr.bf16.mxu0 0
    %216 = vmatpush1.bf16.msra.mxu0 %v211
    %217 = vmatprep.subr.bf16.mxu0 0
    %218 = vmatpush1.bf16.msra.mxu0 %v212
    %219 = vmatprep.subr.bf16.mxu0 0
    %220 = vmatpush1.bf16.msra.mxu0 0
    %221 = vmatprep.subr.bf16.mxu0 0
    %222 = vmatpush1.bf16.msra.mxu0 0
    %223 = vmatprep.subr.bf16.mxu0 0
    %224 = vmatpush1.bf16.msra.mxu0 0
    %225 = vmatprep.subr.bf16.mxu0 0
    %226 = vmatpush1.bf16.msra.mxu0 0
    %227 = vmatprep.subr.bf16.mxu0 0
    %228 = vmatpush1.bf16.msra.mxu0 0
    %229 = vmatprep.subr.bf16.mxu0 0
    %230 = vmatpush1.bf16.msra.mxu0 0
    %231 = vmatprep.subr.bf16.mxu0 0
    %232 = vmatpush1.bf16.msra.mxu0 0
    %233 = vmatprep.subr.bf16.mxu0 0
    %234 = vmatpush1.bf16.msra.mxu0 0
    %235 = vmatprep.subr.bf16.mxu0 0
    %236 = vmatpush1.bf16.msra.mxu0 0
    %237 = vmatprep.subr.bf16.mxu0 0
    %238 = vmatpush1.bf16.msra.mxu0 0
    %239 = vmatprep.subr.bf16.mxu0 0
    %240 = vmatpush1.bf16.msra.mxu0 0
    %241 = vmatprep.subr.bf16.mxu0 0
    %242 = vmatpush1.bf16.msra.mxu0 0
    %243 = vmatprep.subr.bf16.mxu0 0
    %244 = vmatpush1.bf16.msra.mxu0 0
    %245 = vmatprep.subr.bf16.mxu0 0
    %246 = vmatpush1.bf16.msra.mxu0 0
    %247 = vmatprep.mubr.bf16.mxu0 0
    %248 = vmatmul.mubr.bf16.gmra.mrb[0].mxu0 %v61
    %v249 = vpop.f32.mrb[0].mxu0
    %v250 = vadd.f32 0.0, %v249
    %v251 = vpop.f32.mrb[0].mxu0
    %v252 = vpop.f32.mrb[0].mxu0
    %v253 = vpop.f32.mrb[0].mxu0
    %254 = vdwg.mxu0
    %v255 = vadd.f32 %v198, %v250
    %v256 = vxor.u32 %v255, 2147483648
    %v257 = vmul.f32 %v256, 1.442695
    %v258 = vpow.pop %v257
    %v259 = vadd.f32 %v258, 1.0
    %v260 = vrcp.pop %v259
    %v261 = vmul.f32 1.0, %v260
    %v263 = vlaneseq
    %v264 = vshrl.u32 %v263, 7
    %v265 = vsub.s32 0, %v264
    %v266 = vrot.slane %v45, %v265
    %267 = vrot.lane.b32.xlu0 %v266, 64
    %v268 = vpop.permute.xlu0 %267
    %v270 = vadd.f32 %v250, %v268
    %272 = vrot.lane.b32.xlu0 %v270, 64
    %v273 = vpop.permute.xlu0 %272
    %v275 = vmul.f32 %v261, %v273
    %277 = vrot.lane.b32.xlu0 %v275, 64
    %v278 = vpop.permute.xlu0 %277
    %v280 = vadd.f32 %v198, %v278
    %v281 = vtanh.pop %v280
    %v282 = vsub.f32 1.0, %v261
    %284 = vrot.lane.b32.xlu0 %v281, 96
    %v285 = vpop.permute.xlu0 %284
    %v287 = vmul.f32 %v282, %v285
    %v288 = vmul.f32 %v261, 0.0
    %v289 = vadd.f32 %v287, %v288
    %s290 = scalar_lea.vmem %s0, 2
    %v291 = vld [vmem:[%s290] sm:$0x3]
    %292 = vmatprep.subr.bf16.mxu0 0
    %293 = vmatpush1.bf16.msra.mxu0 %v55
    %294 = vmatprep.subr.bf16.mxu0 0
    %295 = vmatpush1.bf16.msra.mxu0 %v56
    %296 = vmatprep.subr.bf16.mxu0 0
    %297 = vmatpush1.bf16.msra.mxu0 0
    %298 = vmatprep.subr.bf16.mxu0 0
    %299 = vmatpush1.bf16.msra.mxu0 0
    %300 = vmatprep.subr.bf16.mxu0 0
    %301 = vmatpush1.bf16.msra.mxu0 0
    %302 = vmatprep.subr.bf16.mxu0 0
    %303 = vmatpush1.bf16.msra.mxu0 0
    %304 = vmatprep.subr.bf16.mxu0 0
    %305 = vmatpush1.bf16.msra.mxu0 0
    %306 = vmatprep.subr.bf16.mxu0 0
    %307 = vmatpush1.bf16.msra.mxu0 0
    %308 = vmatprep.subr.bf16.mxu0 0
    %309 = vmatpush1.bf16.msra.mxu0 0
    %310 = vmatprep.subr.bf16.mxu0 0
    %311 = vmatpush1.bf16.msra.mxu0 0
    %312 = vmatprep.subr.bf16.mxu0 0
    %313 = vmatpush1.bf16.msra.mxu0 0
    %314 = vmatprep.subr.bf16.mxu0 0
    %315 = vmatpush1.bf16.msra.mxu0 0
    %316 = vmatprep.subr.bf16.mxu0 0
    %317 = vmatpush1.bf16.msra.mxu0 0
    %318 = vmatprep.subr.bf16.mxu0 0
    %319 = vmatpush1.bf16.msra.mxu0 0
    %320 = vmatprep.subr.bf16.mxu0 0
    %321 = vmatpush1.bf16.msra.mxu0 0
    %322 = vmatprep.subr.bf16.mxu0 0
    %323 = vmatpush1.bf16.msra.mxu0 0
    %324 = vmatprep.mubr.bf16.mxu0 0
    %325 = vmatmul.mubr.bf16.gmra.mrb[0].mxu0 %v161
    %v326 = vpop.f32.mrb[0].mxu0
    %v327 = vadd.f32 0.0, %v326
    %v328 = vpop.f32.mrb[0].mxu0
    %v329 = vpop.f32.mrb[0].mxu0
    %v330 = vpop.f32.mrb[0].mxu0
    %331 = vdwg.mxu0
    %v332 = vadd.f32 %v291, %v327
    %v333 = vxor.u32 %v332, 2147483648
    %v334 = vmul.f32 %v333, 1.442695
    %v335 = vpow.pop %v334
    %v336 = vadd.f32 %v335, 1.0
    %v337 = vrcp.pop %v336
    %v338 = vmul.f32 1.0, %v337
    %v339 = vadd.f32 %v327, %v116
    %341 = vrot.lane.b32.xlu0 %v339, 64
    %v342 = vpop.permute.xlu0 %341
    %v344 = vmul.f32 %v338, %v342
    %346 = vrot.lane.b32.xlu0 %v344, 64
    %v347 = vpop.permute.xlu0 %346
    %v349 = vadd.f32 %v291, %v347
    %v350 = vtanh.pop %v349
    %v351 = vsub.f32 1.0, %v338
    %353 = vrot.lane.b32.xlu0 %v350, 96
    %v354 = vpop.permute.xlu0 %353
    %v356 = vmul.f32 %v351, %v354
    %v357 = vmul.f32 %v338, %v137
    %v358 = vadd.f32 %v356, %v357
    %v359 = vpack.c.bf16 %v358, %v358
    %361 = vrot.lane.b32.xlu0 %v359, 96
    %v362 = vpop.permute.xlu0 %361
    %v364 = vsel %vm59, %v362, 0
    %366 = vmatprep.subr.bf16.mxu0 0
    %367 = vmatpush1.bf16.msra.mxu0 %v156
    %368 = vmatprep.subr.bf16.mxu0 0
    %369 = vmatpush1.bf16.msra.mxu0 %v157
    %370 = vmatprep.subr.bf16.mxu0 0
    %371 = vmatpush1.bf16.msra.mxu0 0
    %372 = vmatprep.subr.bf16.mxu0 0
    %373 = vmatpush1.bf16.msra.mxu0 0
    %374 = vmatprep.subr.bf16.mxu0 0
    %375 = vmatpush1.bf16.msra.mxu0 0
    %376 = vmatprep.subr.bf16.mxu0 0
    %377 = vmatpush1.bf16.msra.mxu0 0
    %378 = vmatprep.subr.bf16.mxu0 0
    %379 = vmatpush1.bf16.msra.mxu0 0
    %380 = vmatprep.subr.bf16.mxu0 0
    %381 = vmatpush1.bf16.msra.mxu0 0
    %382 = vmatprep.subr.bf16.mxu0 0
    %383 = vmatpush1.bf16.msra.mxu0 0
    %384 = vmatprep.subr.bf16.mxu0 0
    %385 = vmatpush1.bf16.msra.mxu0 0
    %386 = vmatprep.subr.bf16.mxu0 0
    %387 = vmatpush1.bf16.msra.mxu0 0
    %388 = vmatprep.subr.bf16.mxu0 0
    %389 = vmatpush1.bf16.msra.mxu0 0
    %390 = vmatprep.subr.bf16.mxu0 0
    %391 = vmatpush1.bf16.msra.mxu0 0
    %392 = vmatprep.subr.bf16.mxu0 0
    %393 = vmatpush1.bf16.msra.mxu0 0
    %394 = vmatprep.subr.bf16.mxu0 0
    %395 = vmatpush1.bf16.msra.mxu0 0
    %396 = vmatprep.subr.bf16.mxu0 0
    %397 = vmatpush1.bf16.msra.mxu0 0
    %398 = vmatprep.mubr.bf16.mxu0 0
    %399 = vmatmul.mubr.bf16.gmra.mrb[0].mxu0 %v364
    %v400 = vpop.f32.mrb[0].mxu0
    %v401 = vadd.f32 %v143, %v400
    %v402 = vpop.f32.mrb[0].mxu0
    %v403 = vpop.f32.mrb[0].mxu0
    %v404 = vpop.f32.mrb[0].mxu0
    %405 = vdwg.mxu0
    %v406 = vpack.c.bf16 %v289, %v289
    %408 = vrot.lane.b32.xlu0 %v406, 96
    %v409 = vpop.permute.xlu0 %408
    %v411 = vsel %vm59, %v409, 0
    %413 = vmatprep.subr.bf16.mxu0 0
    %414 = vmatpush1.bf16.msra.mxu0 %v211
    %415 = vmatprep.subr.bf16.mxu0 0
    %416 = vmatpush1.bf16.msra.mxu0 %v212
    %417 = vmatprep.subr.bf16.mxu0 0
    %418 = vmatpush1.bf16.msra.mxu0 0
    %419 = vmatprep.subr.bf16.mxu0 0
    %420 = vmatpush1.bf16.msra.mxu0 0
    %421 = vmatprep.subr.bf16.mxu0 0
    %422 = vmatpush1.bf16.msra.mxu0 0
    %423 = vmatprep.subr.bf16.mxu0 0
    %424 = vmatpush1.bf16.msra.mxu0 0
    %425 = vmatprep.subr.bf16.mxu0 0
    %426 = vmatpush1.bf16.msra.mxu0 0
    %427 = vmatprep.subr.bf16.mxu0 0
    %428 = vmatpush1.bf16.msra.mxu0 0
    %429 = vmatprep.subr.bf16.mxu0 0
    %430 = vmatpush1.bf16.msra.mxu0 0
    %431 = vmatprep.subr.bf16.mxu0 0
    %432 = vmatpush1.bf16.msra.mxu0 0
    %433 = vmatprep.subr.bf16.mxu0 0
    %434 = vmatpush1.bf16.msra.mxu0 0
    %435 = vmatprep.subr.bf16.mxu0 0
    %436 = vmatpush1.bf16.msra.mxu0 0
    %437 = vmatprep.subr.bf16.mxu0 0
    %438 = vmatpush1.bf16.msra.mxu0 0
    %439 = vmatprep.subr.bf16.mxu0 0
    %440 = vmatpush1.bf16.msra.mxu0 0
    %441 = vmatprep.subr.bf16.mxu0 0
    %442 = vmatpush1.bf16.msra.mxu0 0
    %443 = vmatprep.subr.bf16.mxu0 0
    %444 = vmatpush1.bf16.msra.mxu0 0
    %445 = vmatprep.mubr.bf16.mxu0 0
    %446 = vmatmul.mubr.bf16.gmra.mrb[0].mxu0 %v411
    %v447 = vpop.f32.mrb[0].mxu0
    %v448 = vadd.f32 0.0, %v447
    %v449 = vpop.f32.mrb[0].mxu0
    %v450 = vpop.f32.mrb[0].mxu0
    %v451 = vpop.f32.mrb[0].mxu0
    %452 = vdwg.mxu0
    %v453 = vadd.f32 %v401, %v448
    %v454 = vxor.u32 %v453, 2147483648
    %v455 = vmul.f32 %v454, 1.442695
    %v456 = vpow.pop %v455
    %v457 = vadd.f32 %v456, 1.0
    %v458 = vrcp.pop %v457
    %v459 = vmul.f32 1.0, %v458
    %v460 = vadd.f32 %v448, %v268
    %462 = vrot.lane.b32.xlu0 %v460, 64
    %v463 = vpop.permute.xlu0 %462
    %v465 = vmul.f32 %v459, %v463
    %467 = vrot.lane.b32.xlu0 %v465, 64
    %v468 = vpop.permute.xlu0 %467
    %v470 = vadd.f32 %v401, %v468
    %v471 = vtanh.pop %v470
    %v472 = vsub.f32 1.0, %v459
    %474 = vrot.lane.b32.xlu0 %v471, 96
    %v475 = vpop.permute.xlu0 %474
    %v477 = vmul.f32 %v472, %v475
    %v478 = vmul.f32 %v459, %v289
    %v479 = vadd.f32 %v477, %v478
    %s480 = scalar_lea.vmem %s0, 4
    %v481 = vld [vmem:[%s480] sm:$0x3]
    %482 = vmatprep.subr.bf16.mxu0 0
    %483 = vmatpush1.bf16.msra.mxu0 %v55
    %484 = vmatprep.subr.bf16.mxu0 0
    %485 = vmatpush1.bf16.msra.mxu0 %v56
    %486 = vmatprep.subr.bf16.mxu0 0
    %487 = vmatpush1.bf16.msra.mxu0 0
    %488 = vmatprep.subr.bf16.mxu0 0
    %489 = vmatpush1.bf16.msra.mxu0 0
    %490 = vmatprep.subr.bf16.mxu0 0
    %491 = vmatpush1.bf16.msra.mxu0 0
    %492 = vmatprep.subr.bf16.mxu0 0
    %493 = vmatpush1.bf16.msra.mxu0 0
    %494 = vmatprep.subr.bf16.mxu0 0
    %495 = vmatpush1.bf16.msra.mxu0 0
    %496 = vmatprep.subr.bf16.mxu0 0
    %497 = vmatpush1.bf16.msra.mxu0 0
    %498 = vmatprep.subr.bf16.mxu0 0
    %499 = vmatpush1.bf16.msra.mxu0 0
    %500 = vmatprep.subr.bf16.mxu0 0
    %501 = vmatpush1.bf16.msra.mxu0 0
    %502 = vmatprep.subr.bf16.mxu0 0
    %503 = vmatpush1.bf16.msra.mxu0 0
    %504 = vmatprep.subr.bf16.mxu0 0
    %505 = vmatpush1.bf16.msra.mxu0 0
    %506 = vmatprep.subr.bf16.mxu0 0
    %507 = vmatpush1.bf16.msra.mxu0 0
    %508 = vmatprep.subr.bf16.mxu0 0
    %509 = vmatpush1.bf16.msra.mxu0 0
    %510 = vmatprep.subr.bf16.mxu0 0
    %511 = vmatpush1.bf16.msra.mxu0 0
    %512 = vmatprep.subr.bf16.mxu0 0
    %513 = vmatpush1.bf16.msra.mxu0 0
    %514 = vmatprep.mubr.bf16.mxu0 0
    %515 = vmatmul.mubr.bf16.gmra.mrb[0].mxu0 %v364
    %v516 = vpop.f32.mrb[0].mxu0
    %v517 = vadd.f32 0.0, %v516
    %v518 = vpop.f32.mrb[0].mxu0
    %v519 = vpop.f32.mrb[0].mxu0
    %v520 = vpop.f32.mrb[0].mxu0
    %521 = vdwg.mxu0
    %v522 = vadd.f32 %v481, %v517
    %v523 = vxor.u32 %v522, 2147483648
    %v524 = vmul.f32 %v523, 1.442695
    %v525 = vpow.pop %v524
    %v526 = vadd.f32 %v525, 1.0
    %v527 = vrcp.pop %v526
    %v528 = vmul.f32 1.0, %v527
    %v529 = vadd.f32 %v517, %v116
    %531 = vrot.lane.b32.xlu0 %v529, 64
    %v532 = vpop.permute.xlu0 %531
    %v534 = vmul.f32 %v528, %v532
    %536 = vrot.lane.b32.xlu0 %v534, 64
    %v537 = vpop.permute.xlu0 %536
    %v539 = vadd.f32 %v481, %v537
    %v540 = vtanh.pop %v539
    %v541 = vsub.f32 1.0, %v528
    %543 = vrot.lane.b32.xlu0 %v540, 96
    %v544 = vpop.permute.xlu0 %543
    %v546 = vmul.f32 %v541, %v544
    %v547 = vmul.f32 %v528, %v358
    %v548 = vadd.f32 %v546, %v547
    %v549 = vpack.c.bf16 %v548, %v548
    %551 = vrot.lane.b32.xlu0 %v549, 96
    %v552 = vpop.permute.xlu0 %551
    %v554 = vsel %vm59, %v552, 0
    %556 = vmatprep.subr.bf16.mxu0 0
    %557 = vmatpush1.bf16.msra.mxu0 %v156
    %558 = vmatprep.subr.bf16.mxu0 0
    %559 = vmatpush1.bf16.msra.mxu0 %v157
    %560 = vmatprep.subr.bf16.mxu0 0
    %561 = vmatpush1.bf16.msra.mxu0 0
    %562 = vmatprep.subr.bf16.mxu0 0
    %563 = vmatpush1.bf16.msra.mxu0 0
    %564 = vmatprep.subr.bf16.mxu0 0
    %565 = vmatpush1.bf16.msra.mxu0 0
    %566 = vmatprep.subr.bf16.mxu0 0
    %567 = vmatpush1.bf16.msra.mxu0 0
    %568 = vmatprep.subr.bf16.mxu0 0
    %569 = vmatpush1.bf16.msra.mxu0 0
    %570 = vmatprep.subr.bf16.mxu0 0
    %571 = vmatpush1.bf16.msra.mxu0 0
    %572 = vmatprep.subr.bf16.mxu0 0
    %573 = vmatpush1.bf16.msra.mxu0 0
    %574 = vmatprep.subr.bf16.mxu0 0
    %575 = vmatpush1.bf16.msra.mxu0 0
    %576 = vmatprep.subr.bf16.mxu0 0
    %577 = vmatpush1.bf16.msra.mxu0 0
    %578 = vmatprep.subr.bf16.mxu0 0
    %579 = vmatpush1.bf16.msra.mxu0 0
    %580 = vmatprep.subr.bf16.mxu0 0
    %581 = vmatpush1.bf16.msra.mxu0 0
    %582 = vmatprep.subr.bf16.mxu0 0
    %583 = vmatpush1.bf16.msra.mxu0 0
    %584 = vmatprep.subr.bf16.mxu0 0
    %585 = vmatpush1.bf16.msra.mxu0 0
    %586 = vmatprep.subr.bf16.mxu0 0
    %587 = vmatpush1.bf16.msra.mxu0 0
    %588 = vmatprep.mubr.bf16.mxu0 0
    %589 = vmatmul.mubr.bf16.gmra.mrb[0].mxu0 %v554
    %v590 = vpop.f32.mrb[0].mxu0
    %v591 = vadd.f32 %v143, %v590
    %v592 = vpop.f32.mrb[0].mxu0
    %v593 = vpop.f32.mrb[0].mxu0
    %v594 = vpop.f32.mrb[0].mxu0
    %595 = vdwg.mxu0
    %v596 = vpack.c.bf16 %v479, %v479
    %598 = vrot.lane.b32.xlu0 %v596, 96
    %v599 = vpop.permute.xlu0 %598
    %v601 = vsel %vm59, %v599, 0
    %603 = vmatprep.subr.bf16.mxu0 0
    %604 = vmatpush1.bf16.msra.mxu0 %v211
    %605 = vmatprep.subr.bf16.mxu0 0
    %606 = vmatpush1.bf16.msra.mxu0 %v212
    %607 = vmatprep.subr.bf16.mxu0 0
    %608 = vmatpush1.bf16.msra.mxu0 0
    %609 = vmatprep.subr.bf16.mxu0 0
    %610 = vmatpush1.bf16.msra.mxu0 0
    %611 = vmatprep.subr.bf16.mxu0 0
    %612 = vmatpush1.bf16.msra.mxu0 0
    %613 = vmatprep.subr.bf16.mxu0 0
    %614 = vmatpush1.bf16.msra.mxu0 0
    %615 = vmatprep.subr.bf16.mxu0 0
    %616 = vmatpush1.bf16.msra.mxu0 0
    %617 = vmatprep.subr.bf16.mxu0 0
    %618 = vmatpush1.bf16.msra.mxu0 0
    %619 = vmatprep.subr.bf16.mxu0 0
    %620 = vmatpush1.bf16.msra.mxu0 0
    %621 = vmatprep.subr.bf16.mxu0 0
    %622 = vmatpush1.bf16.msra.mxu0 0
    %623 = vmatprep.subr.bf16.mxu0 0
    %624 = vmatpush1.bf16.msra.mxu0 0
    %625 = vmatprep.subr.bf16.mxu0 0
    %626 = vmatpush1.bf16.msra.mxu0 0
    %627 = vmatprep.subr.bf16.mxu0 0
    %628 = vmatpush1.bf16.msra.mxu0 0
    %629 = vmatprep.subr.bf16.mxu0 0
    %630 = vmatpush1.bf16.msra.mxu0 0
    %631 = vmatprep.subr.bf16.mxu0 0
    %632 = vmatpush1.bf16.msra.mxu0 0
    %633 = vmatprep.subr.bf16.mxu0 0
    %634 = vmatpush1.bf16.msra.mxu0 0
    %635 = vmatprep.mubr.bf16.mxu0 0
    %636 = vmatmul.mubr.bf16.gmra.mrb[0].mxu0 %v601
    %v637 = vpop.f32.mrb[0].mxu0
    %v638 = vadd.f32 0.0, %v637
    %v639 = vpop.f32.mrb[0].mxu0
    %v640 = vpop.f32.mrb[0].mxu0
    %v641 = vpop.f32.mrb[0].mxu0
    %642 = vdwg.mxu0
    %v643 = vadd.f32 %v591, %v638
    %v644 = vxor.u32 %v643, 2147483648
    %v645 = vmul.f32 %v644, 1.442695
    %v646 = vpow.pop %v645
    %v647 = vadd.f32 %v646, 1.0
    %v648 = vrcp.pop %v647
    %v649 = vmul.f32 1.0, %v648
    %v650 = vadd.f32 %v638, %v268
    %652 = vrot.lane.b32.xlu0 %v650, 64
    %v653 = vpop.permute.xlu0 %652
    %v655 = vmul.f32 %v649, %v653
    %657 = vrot.lane.b32.xlu0 %v655, 64
    %v658 = vpop.permute.xlu0 %657
    %v660 = vadd.f32 %v591, %v658
    %v661 = vtanh.pop %v660
    %v662 = vsub.f32 1.0, %v649
    %664 = vrot.lane.b32.xlu0 %v661, 96
    %v665 = vpop.permute.xlu0 %664
    %v667 = vmul.f32 %v662, %v665
    %v668 = vmul.f32 %v649, %v479
    %v669 = vadd.f32 %v667, %v668
    %s670 = scalar_lea.vmem %s0, 6
    %v671 = vld [vmem:[%s670] sm:$0x3]
    %672 = vmatprep.subr.bf16.mxu0 0
    %673 = vmatpush1.bf16.msra.mxu0 %v55
    %674 = vmatprep.subr.bf16.mxu0 0
    %675 = vmatpush1.bf16.msra.mxu0 %v56
    %676 = vmatprep.subr.bf16.mxu0 0
    %677 = vmatpush1.bf16.msra.mxu0 0
    %678 = vmatprep.subr.bf16.mxu0 0
    %679 = vmatpush1.bf16.msra.mxu0 0
    %680 = vmatprep.subr.bf16.mxu0 0
    %681 = vmatpush1.bf16.msra.mxu0 0
    %682 = vmatprep.subr.bf16.mxu0 0
    %683 = vmatpush1.bf16.msra.mxu0 0
    %684 = vmatprep.subr.bf16.mxu0 0
    %685 = vmatpush1.bf16.msra.mxu0 0
    %686 = vmatprep.subr.bf16.mxu0 0
    %687 = vmatpush1.bf16.msra.mxu0 0
    %688 = vmatprep.subr.bf16.mxu0 0
    %689 = vmatpush1.bf16.msra.mxu0 0
    %690 = vmatprep.subr.bf16.mxu0 0
    %691 = vmatpush1.bf16.msra.mxu0 0
    %692 = vmatprep.subr.bf16.mxu0 0
    %693 = vmatpush1.bf16.msra.mxu0 0
    %694 = vmatprep.subr.bf16.mxu0 0
    %695 = vmatpush1.bf16.msra.mxu0 0
    %696 = vmatprep.subr.bf16.mxu0 0
    %697 = vmatpush1.bf16.msra.mxu0 0
    %698 = vmatprep.subr.bf16.mxu0 0
    %699 = vmatpush1.bf16.msra.mxu0 0
    %700 = vmatprep.subr.bf16.mxu0 0
    %701 = vmatpush1.bf16.msra.mxu0 0
    %702 = vmatprep.subr.bf16.mxu0 0
    %703 = vmatpush1.bf16.msra.mxu0 0
    %704 = vmatprep.mubr.bf16.mxu0 0
    %705 = vmatmul.mubr.bf16.gmra.mrb[0].mxu0 %v554
    %v706 = vpop.f32.mrb[0].mxu0
    %v707 = vadd.f32 0.0, %v706
    %v708 = vpop.f32.mrb[0].mxu0
    %v709 = vpop.f32.mrb[0].mxu0
    %v710 = vpop.f32.mrb[0].mxu0
    %711 = vdwg.mxu0
    %v712 = vadd.f32 %v671, %v707
    %v713 = vxor.u32 %v712, 2147483648
    %v714 = vmul.f32 %v713, 1.442695
    %v715 = vpow.pop %v714
    %v716 = vadd.f32 %v715, 1.0
    %v717 = vrcp.pop %v716
    %v718 = vmul.f32 1.0, %v717
    %v719 = vadd.f32 %v707, %v116
    %721 = vrot.lane.b32.xlu0 %v719, 64
    %v722 = vpop.permute.xlu0 %721
    %v724 = vmul.f32 %v718, %v722
    %726 = vrot.lane.b32.xlu0 %v724, 64
    %v727 = vpop.permute.xlu0 %726
    %v729 = vadd.f32 %v671, %v727
    %v730 = vtanh.pop %v729
    %v731 = vsub.f32 1.0, %v718
    %733 = vrot.lane.b32.xlu0 %v730, 96
    %v734 = vpop.permute.xlu0 %733
    %v736 = vmul.f32 %v731, %v734
    %v737 = vmul.f32 %v718, %v548
    %v738 = vadd.f32 %v736, %v737
    %v739 = vpack.c.bf16 %v738, %v738
    %741 = vrot.lane.b32.xlu0 %v739, 96
    %v742 = vpop.permute.xlu0 %741
    %v744 = vsel %vm59, %v742, 0
    %746 = vmatprep.subr.bf16.mxu0 0
    %747 = vmatpush1.bf16.msra.mxu0 %v156
    %748 = vmatprep.subr.bf16.mxu0 0
    %749 = vmatpush1.bf16.msra.mxu0 %v157
    %750 = vmatprep.subr.bf16.mxu0 0
    %751 = vmatpush1.bf16.msra.mxu0 0
    %752 = vmatprep.subr.bf16.mxu0 0
    %753 = vmatpush1.bf16.msra.mxu0 0
    %754 = vmatprep.subr.bf16.mxu0 0
    %755 = vmatpush1.bf16.msra.mxu0 0
    %756 = vmatprep.subr.bf16.mxu0 0
    %757 = vmatpush1.bf16.msra.mxu0 0
    %758 = vmatprep.subr.bf16.mxu0 0
    %759 = vmatpush1.bf16.msra.mxu0 0
    %760 = vmatprep.subr.bf16.mxu0 0
    %761 = vmatpush1.bf16.msra.mxu0 0
    %762 = vmatprep.subr.bf16.mxu0 0
    %763 = vmatpush1.bf16.msra.mxu0 0
    %764 = vmatprep.subr.bf16.mxu0 0
    %765 = vmatpush1.bf16.msra.mxu0 0
    %766 = vmatprep.subr.bf16.mxu0 0
    %767 = vmatpush1.bf16.msra.mxu0 0
    %768 = vmatprep.subr.bf16.mxu0 0
    %769 = vmatpush1.bf16.msra.mxu0 0
    %770 = vmatprep.subr.bf16.mxu0 0
    %771 = vmatpush1.bf16.msra.mxu0 0
    %772 = vmatprep.subr.bf16.mxu0 0
    %773 = vmatpush1.bf16.msra.mxu0 0
    %774 = vmatprep.subr.bf16.mxu0 0
    %775 = vmatpush1.bf16.msra.mxu0 0
    %776 = vmatprep.subr.bf16.mxu0 0
    %777 = vmatpush1.bf16.msra.mxu0 0
    %778 = vmatprep.mubr.bf16.mxu0 0
    %779 = vmatmul.mubr.bf16.gmra.mrb[0].mxu0 %v744
    %v780 = vpop.f32.mrb[0].mxu0
    %v781 = vadd.f32 %v143, %v780
    %v782 = vpop.f32.mrb[0].mxu0
    %v783 = vpop.f32.mrb[0].mxu0
    %v784 = vpop.f32.mrb[0].mxu0
    %785 = vdwg.mxu0
    %v786 = vpack.c.bf16 %v669, %v669
    %788 = vrot.lane.b32.xlu0 %v786, 96
    %v789 = vpop.permute.xlu0 %788
    %v791 = vsel %vm59, %v789, 0
    %793 = vmatprep.subr.bf16.mxu0 0
    %794 = vmatpush1.bf16.msra.mxu0 %v211
    %795 = vmatprep.subr.bf16.mxu0 0
    %796 = vmatpush1.bf16.msra.mxu0 %v212
    %797 = vmatprep.subr.bf16.mxu0 0
    %798 = vmatpush1.bf16.msra.mxu0 0
    %799 = vmatprep.subr.bf16.mxu0 0
    %800 = vmatpush1.bf16.msra.mxu0 0
    %801 = vmatprep.subr.bf16.mxu0 0
    %802 = vmatpush1.bf16.msra.mxu0 0
    %803 = vmatprep.subr.bf16.mxu0 0
    %804 = vmatpush1.bf16.msra.mxu0 0
    %805 = vmatprep.subr.bf16.mxu0 0
    %806 = vmatpush1.bf16.msra.mxu0 0
    %807 = vmatprep.subr.bf16.mxu0 0
    %808 = vmatpush1.bf16.msra.mxu0 0
    %809 = vmatprep.subr.bf16.mxu0 0
    %810 = vmatpush1.bf16.msra.mxu0 0
    %811 = vmatprep.subr.bf16.mxu0 0
    %812 = vmatpush1.bf16.msra.mxu0 0
    %813 = vmatprep.subr.bf16.mxu0 0
    %814 = vmatpush1.bf16.msra.mxu0 0
    %815 = vmatprep.subr.bf16.mxu0 0
    %816 = vmatpush1.bf16.msra.mxu0 0
    %817 = vmatprep.subr.bf16.mxu0 0
    %818 = vmatpush1.bf16.msra.mxu0 0
    %819 = vmatprep.subr.bf16.mxu0 0
    %820 = vmatpush1.bf16.msra.mxu0 0
    %821 = vmatprep.subr.bf16.mxu0 0
    %822 = vmatpush1.bf16.msra.mxu0 0
    %823 = vmatprep.subr.bf16.mxu0 0
    %824 = vmatpush1.bf16.msra.mxu0 0
    %825 = vmatprep.mubr.bf16.mxu0 0
    %826 = vmatmul.mubr.bf16.gmra.mrb[0].mxu0 %v791
    %v827 = vpop.f32.mrb[0].mxu0
    %v828 = vadd.f32 0.0, %v827
    %v829 = vpop.f32.mrb[0].mxu0
    %v830 = vpop.f32.mrb[0].mxu0
    %v831 = vpop.f32.mrb[0].mxu0
    %832 = vdwg.mxu0
    %v833 = vadd.f32 %v781, %v828
    %v834 = vxor.u32 %v833, 2147483648
    %v835 = vmul.f32 %v834, 1.442695
    %v836 = vpow.pop %v835
    %v837 = vadd.f32 %v836, 1.0
    %v838 = vrcp.pop %v837
    %v839 = vmul.f32 1.0, %v838
    %v840 = vadd.f32 %v828, %v268
    %842 = vrot.lane.b32.xlu0 %v840, 64
    %v843 = vpop.permute.xlu0 %842
    %v845 = vmul.f32 %v839, %v843
    %847 = vrot.lane.b32.xlu0 %v845, 64
    %v848 = vpop.permute.xlu0 %847
    %v850 = vadd.f32 %v781, %v848
    %v851 = vtanh.pop %v850
    %v852 = vsub.f32 1.0, %v839
    %854 = vrot.lane.b32.xlu0 %v851, 96
    %v855 = vpop.permute.xlu0 %854
    %v857 = vmul.f32 %v852, %v855
    %v858 = vmul.f32 %v839, %v669
    %v859 = vadd.f32 %v857, %v858
    %s860 = scalar_lea.vmem %s0, 8
    %v861 = vld [vmem:[%s860] sm:$0x3]
    %862 = vmatprep.subr.bf16.mxu0 0
    %863 = vmatpush1.bf16.msra.mxu0 %v55
    %864 = vmatprep.subr.bf16.mxu0 0
    %865 = vmatpush1.bf16.msra.mxu0 %v56
    %866 = vmatprep.subr.bf16.mxu0 0
    %867 = vmatpush1.bf16.msra.mxu0 0
    %868 = vmatprep.subr.bf16.mxu0 0
    %869 = vmatpush1.bf16.msra.mxu0 0
    %870 = vmatprep.subr.bf16.mxu0 0
    %871 = vmatpush1.bf16.msra.mxu0 0
    %872 = vmatprep.subr.bf16.mxu0 0
    %873 = vmatpush1.bf16.msra.mxu0 0
    %874 = vmatprep.subr.bf16.mxu0 0
    %875 = vmatpush1.bf16.msra.mxu0 0
    %876 = vmatprep.subr.bf16.mxu0 0
    %877 = vmatpush1.bf16.msra.mxu0 0
    %878 = vmatprep.subr.bf16.mxu0 0
    %879 = vmatpush1.bf16.msra.mxu0 0
    %880 = vmatprep.subr.bf16.mxu0 0
    %881 = vmatpush1.bf16.msra.mxu0 0
    %882 = vmatprep.subr.bf16.mxu0 0
    %883 = vmatpush1.bf16.msra.mxu0 0
    %884 = vmatprep.subr.bf16.mxu0 0
    %885 = vmatpush1.bf16.msra.mxu0 0
    %886 = vmatprep.subr.bf16.mxu0 0
    %887 = vmatpush1.bf16.msra.mxu0 0
    %888 = vmatprep.subr.bf16.mxu0 0
    %889 = vmatpush1.bf16.msra.mxu0 0
    %890 = vmatprep.subr.bf16.mxu0 0
    %891 = vmatpush1.bf16.msra.mxu0 0
    %892 = vmatprep.subr.bf16.mxu0 0
    %893 = vmatpush1.bf16.msra.mxu0 0
    %894 = vmatprep.mubr.bf16.mxu0 0
    %895 = vmatmul.mubr.bf16.gmra.mrb[0].mxu0 %v744
    %v896 = vpop.f32.mrb[0].mxu0
    %v897 = vadd.f32 0.0, %v896
    %v898 = vpop.f32.mrb[0].mxu0
    %v899 = vpop.f32.mrb[0].mxu0
    %v900 = vpop.f32.mrb[0].mxu0
    %901 = vdwg.mxu0
    %v902 = vadd.f32 %v861, %v897
    %v903 = vxor.u32 %v902, 2147483648
    %v904 = vmul.f32 %v903, 1.442695
    %v905 = vpow.pop %v904
    %v906 = vadd.f32 %v905, 1.0
    %v907 = vrcp.pop %v906
    %v908 = vmul.f32 1.0, %v907
    %v909 = vadd.f32 %v897, %v116
    %911 = vrot.lane.b32.xlu0 %v909, 64
    %v912 = vpop.permute.xlu0 %911
    %v914 = vmul.f32 %v908, %v912
    %916 = vrot.lane.b32.xlu0 %v914, 64
    %v917 = vpop.permute.xlu0 %916
    %v919 = vadd.f32 %v861, %v917
    %v920 = vtanh.pop %v919
    %v921 = vsub.f32 1.0, %v908
    %923 = vrot.lane.b32.xlu0 %v920, 96
    %v924 = vpop.permute.xlu0 %923
    %v926 = vmul.f32 %v921, %v924
    %v927 = vmul.f32 %v908, %v738
    %v928 = vadd.f32 %v926, %v927
    %v929 = vpack.c.bf16 %v928, %v928
    %931 = vrot.lane.b32.xlu0 %v929, 96
    %v932 = vpop.permute.xlu0 %931
    %v934 = vsel %vm59, %v932, 0
    %936 = vmatprep.subr.bf16.mxu0 0
    %937 = vmatpush1.bf16.msra.mxu0 %v156
    %938 = vmatprep.subr.bf16.mxu0 0
    %939 = vmatpush1.bf16.msra.mxu0 %v157
    %940 = vmatprep.subr.bf16.mxu0 0
    %941 = vmatpush1.bf16.msra.mxu0 0
    %942 = vmatprep.subr.bf16.mxu0 0
    %943 = vmatpush1.bf16.msra.mxu0 0
    %944 = vmatprep.subr.bf16.mxu0 0
    %945 = vmatpush1.bf16.msra.mxu0 0
    %946 = vmatprep.subr.bf16.mxu0 0
    %947 = vmatpush1.bf16.msra.mxu0 0
    %948 = vmatprep.subr.bf16.mxu0 0
    %949 = vmatpush1.bf16.msra.mxu0 0
    %950 = vmatprep.subr.bf16.mxu0 0
    %951 = vmatpush1.bf16.msra.mxu0 0
    %952 = vmatprep.subr.bf16.mxu0 0
    %953 = vmatpush1.bf16.msra.mxu0 0
    %954 = vmatprep.subr.bf16.mxu0 0
    %955 = vmatpush1.bf16.msra.mxu0 0
    %956 = vmatprep.subr.bf16.mxu0 0
    %957 = vmatpush1.bf16.msra.mxu0 0
    %958 = vmatprep.subr.bf16.mxu0 0
    %959 = vmatpush1.bf16.msra.mxu0 0
    %960 = vmatprep.subr.bf16.mxu0 0
    %961 = vmatpush1.bf16.msra.mxu0 0
    %962 = vmatprep.subr.bf16.mxu0 0
    %963 = vmatpush1.bf16.msra.mxu0 0
    %964 = vmatprep.subr.bf16.mxu0 0
    %965 = vmatpush1.bf16.msra.mxu0 0
    %966 = vmatprep.subr.bf16.mxu0 0
    %967 = vmatpush1.bf16.msra.mxu0 0
    %968 = vmatprep.mubr.bf16.mxu0 0
    %969 = vmatmul.mubr.bf16.gmra.mrb[0].mxu0 %v934
    %v970 = vpop.f32.mrb[0].mxu0
    %v971 = vadd.f32 %v143, %v970
    %v972 = vpop.f32.mrb[0].mxu0
    %v973 = vpop.f32.mrb[0].mxu0
    %v974 = vpop.f32.mrb[0].mxu0
    %975 = vdwg.mxu0
    %v976 = vpack.c.bf16 %v859, %v859
    %978 = vrot.lane.b32.xlu0 %v976, 96
    %v979 = vpop.permute.xlu0 %978
    %v981 = vsel %vm59, %v979, 0
    %983 = vmatprep.subr.bf16.mxu0 0
    %984 = vmatpush1.bf16.msra.mxu0 %v211
    %985 = vmatprep.subr.bf16.mxu0 0
    %986 = vmatpush1.bf16.msra.mxu0 %v212
    %987 = vmatprep.subr.bf16.mxu0 0
    %988 = vmatpush1.bf16.msra.mxu0 0
    %989 = vmatprep.subr.bf16.mxu0 0
    %990 = vmatpush1.bf16.msra.mxu0 0
    %991 = vmatprep.subr.bf16.mxu0 0
    %992 = vmatpush1.bf16.msra.mxu0 0
    %993 = vmatprep.subr.bf16.mxu0 0
    %994 = vmatpush1.bf16.msra.mxu0 0
    %995 = vmatprep.subr.bf16.mxu0 0
    %996 = vmatpush1.bf16.msra.mxu0 0
    %997 = vmatprep.subr.bf16.mxu0 0
    %998 = vmatpush1.bf16.msra.mxu0 0
    %999 = vmatprep.subr.bf16.mxu0 0
    %1000 = vmatpush1.bf16.msra.mxu0 0
    %1001 = vmatprep.subr.bf16.mxu0 0
    %1002 = vmatpush1.bf16.msra.mxu0 0
    %1003 = vmatprep.subr.bf16.mxu0 0
    %1004 = vmatpush1.bf16.msra.mxu0 0
    %1005 = vmatprep.subr.bf16.mxu0 0
    %1006 = vmatpush1.bf16.msra.mxu0 0
    %1007 = vmatprep.subr.bf16.mxu0 0
    %1008 = vmatpush1.bf16.msra.mxu0 0
    %1009 = vmatprep.subr.bf16.mxu0 0
    %1010 = vmatpush1.bf16.msra.mxu0 0
    %1011 = vmatprep.subr.bf16.mxu0 0
    %1012 = vmatpush1.bf16.msra.mxu0 0
    %1013 = vmatprep.subr.bf16.mxu0 0
    %1014 = vmatpush1.bf16.msra.mxu0 0
    %1015 = vmatprep.mubr.bf16.mxu0 0
    %1016 = vmatmul.mubr.bf16.gmra.mrb[0].mxu0 %v981
    %v1017 = vpop.f32.mrb[0].mxu0
    %v1018 = vadd.f32 0.0, %v1017
    %v1019 = vpop.f32.mrb[0].mxu0
    %v1020 = vpop.f32.mrb[0].mxu0
    %v1021 = vpop.f32.mrb[0].mxu0
    %1022 = vdwg.mxu0
    %v1023 = vadd.f32 %v971, %v1018
    %v1024 = vxor.u32 %v1023, 2147483648
    %v1025 = vmul.f32 %v1024, 1.442695
    %v1026 = vpow.pop %v1025
    %v1027 = vadd.f32 %v1026, 1.0
    %v1028 = vrcp.pop %v1027
    %v1029 = vmul.f32 1.0, %v1028
    %v1030 = vadd.f32 %v1018, %v268
    %1032 = vrot.lane.b32.xlu0 %v1030, 64
    %v1033 = vpop.permute.xlu0 %1032
    %v1035 = vmul.f32 %v1029, %v1033
    %1037 = vrot.lane.b32.xlu0 %v1035, 64
    %v1038 = vpop.permute.xlu0 %1037
    %v1040 = vadd.f32 %v971, %v1038
    %v1041 = vtanh.pop %v1040
    %v1042 = vsub.f32 1.0, %v1029
    %1044 = vrot.lane.b32.xlu0 %v1041, 96
    %v1045 = vpop.permute.xlu0 %1044
    %v1047 = vmul.f32 %v1042, %v1045
    %v1048 = vmul.f32 %v1029, %v859
    %v1049 = vadd.f32 %v1047, %v1048
    %s1050 = scalar_lea.vmem %s0, 10
    %v1051 = vld [vmem:[%s1050] sm:$0x3]
    %1052 = vmatprep.subr.bf16.mxu0 0
    %1053 = vmatpush1.bf16.msra.mxu0 %v55
    %1054 = vmatprep.subr.bf16.mxu0 0
    %1055 = vmatpush1.bf16.msra.mxu0 %v56
    %1056 = vmatprep.subr.bf16.mxu0 0
    %1057 = vmatpush1.bf16.msra.mxu0 0
    %1058 = vmatprep.subr.bf16.mxu0 0
    %1059 = vmatpush1.bf16.msra.mxu0 0
    %1060 = vmatprep.subr.bf16.mxu0 0
    %1061 = vmatpush1.bf16.msra.mxu0 0
    %1062 = vmatprep.subr.bf16.mxu0 0
    %1063 = vmatpush1.bf16.msra.mxu0 0
    %1064 = vmatprep.subr.bf16.mxu0 0
    %1065 = vmatpush1.bf16.msra.mxu0 0
    %1066 = vmatprep.subr.bf16.mxu0 0
    %1067 = vmatpush1.bf16.msra.mxu0 0
    %1068 = vmatprep.subr.bf16.mxu0 0
    %1069 = vmatpush1.bf16.msra.mxu0 0
    %1070 = vmatprep.subr.bf16.mxu0 0
    %1071 = vmatpush1.bf16.msra.mxu0 0
    %1072 = vmatprep.subr.bf16.mxu0 0
    %1073 = vmatpush1.bf16.msra.mxu0 0
    %1074 = vmatprep.subr.bf16.mxu0 0
    %1075 = vmatpush1.bf16.msra.mxu0 0
    %1076 = vmatprep.subr.bf16.mxu0 0
    %1077 = vmatpush1.bf16.msra.mxu0 0
    %1078 = vmatprep.subr.bf16.mxu0 0
    %1079 = vmatpush1.bf16.msra.mxu0 0
    %1080 = vmatprep.subr.bf16.mxu0 0
    %1081 = vmatpush1.bf16.msra.mxu0 0
    %1082 = vmatprep.subr.bf16.mxu0 0
    %1083 = vmatpush1.bf16.msra.mxu0 0
    %1084 = vmatprep.mubr.bf16.mxu0 0
    %1085 = vmatmul.mubr.bf16.gmra.mrb[0].mxu0 %v934
    %v1086 = vpop.f32.mrb[0].mxu0
    %v1087 = vadd.f32 0.0, %v1086
    %v1088 = vpop.f32.mrb[0].mxu0
    %v1089 = vpop.f32.mrb[0].mxu0
    %v1090 = vpop.f32.mrb[0].mxu0
    %1091 = vdwg.mxu0
    %v1092 = vadd.f32 %v1051, %v1087
    %v1093 = vxor.u32 %v1092, 2147483648
    %v1094 = vmul.f32 %v1093, 1.442695
    %v1095 = vpow.pop %v1094
    %v1096 = vadd.f32 %v1095, 1.0
    %v1097 = vrcp.pop %v1096
    %v1098 = vmul.f32 1.0, %v1097
    %v1099 = vadd.f32 %v1087, %v116
    %1101 = vrot.lane.b32.xlu0 %v1099, 64
    %v1102 = vpop.permute.xlu0 %1101
    %v1104 = vmul.f32 %v1098, %v1102
    %1106 = vrot.lane.b32.xlu0 %v1104, 64
    %v1107 = vpop.permute.xlu0 %1106
    %v1109 = vadd.f32 %v1051, %v1107
    %v1110 = vtanh.pop %v1109
    %v1111 = vsub.f32 1.0, %v1098
    %1113 = vrot.lane.b32.xlu0 %v1110, 96
    %v1114 = vpop.permute.xlu0 %1113
    %v1116 = vmul.f32 %v1111, %v1114
    %v1117 = vmul.f32 %v1098, %v928
    %v1118 = vadd.f32 %v1116, %v1117
    %v1119 = vpack.c.bf16 %v1118, %v1118
    %1121 = vrot.lane.b32.xlu0 %v1119, 96
    %v1122 = vpop.permute.xlu0 %1121
    %v1124 = vsel %vm59, %v1122, 0
    %1126 = vmatprep.subr.bf16.mxu0 0
    %1127 = vmatpush1.bf16.msra.mxu0 %v156
    %1128 = vmatprep.subr.bf16.mxu0 0
    %1129 = vmatpush1.bf16.msra.mxu0 %v157
    %1130 = vmatprep.subr.bf16.mxu0 0
    %1131 = vmatpush1.bf16.msra.mxu0 0
    %1132 = vmatprep.subr.bf16.mxu0 0
    %1133 = vmatpush1.bf16.msra.mxu0 0
    %1134 = vmatprep.subr.bf16.mxu0 0
    %1135 = vmatpush1.bf16.msra.mxu0 0
    %1136 = vmatprep.subr.bf16.mxu0 0
    %1137 = vmatpush1.bf16.msra.mxu0 0
    %1138 = vmatprep.subr.bf16.mxu0 0
    %1139 = vmatpush1.bf16.msra.mxu0 0
    %1140 = vmatprep.subr.bf16.mxu0 0
    %1141 = vmatpush1.bf16.msra.mxu0 0
    %1142 = vmatprep.subr.bf16.mxu0 0
    %1143 = vmatpush1.bf16.msra.mxu0 0
    %1144 = vmatprep.subr.bf16.mxu0 0
    %1145 = vmatpush1.bf16.msra.mxu0 0
    %1146 = vmatprep.subr.bf16.mxu0 0
    %1147 = vmatpush1.bf16.msra.mxu0 0
    %1148 = vmatprep.subr.bf16.mxu0 0
    %1149 = vmatpush1.bf16.msra.mxu0 0
    %1150 = vmatprep.subr.bf16.mxu0 0
    %1151 = vmatpush1.bf16.msra.mxu0 0
    %1152 = vmatprep.subr.bf16.mxu0 0
    %1153 = vmatpush1.bf16.msra.mxu0 0
    %1154 = vmatprep.subr.bf16.mxu0 0
    %1155 = vmatpush1.bf16.msra.mxu0 0
    %1156 = vmatprep.subr.bf16.mxu0 0
    %1157 = vmatpush1.bf16.msra.mxu0 0
    %1158 = vmatprep.mubr.bf16.mxu0 0
    %1159 = vmatmul.mubr.bf16.gmra.mrb[0].mxu0 %v1124
    %v1160 = vpop.f32.mrb[0].mxu0
    %v1161 = vadd.f32 %v143, %v1160
    %v1162 = vpop.f32.mrb[0].mxu0
    %v1163 = vpop.f32.mrb[0].mxu0
    %v1164 = vpop.f32.mrb[0].mxu0
    %1165 = vdwg.mxu0
    %v1166 = vpack.c.bf16 %v1049, %v1049
    %1168 = vrot.lane.b32.xlu0 %v1166, 96
    %v1169 = vpop.permute.xlu0 %1168
    %v1171 = vsel %vm59, %v1169, 0
    %1173 = vmatprep.subr.bf16.mxu0 0
    %1174 = vmatpush1.bf16.msra.mxu0 %v211
    %1175 = vmatprep.subr.bf16.mxu0 0
    %1176 = vmatpush1.bf16.msra.mxu0 %v212
    %1177 = vmatprep.subr.bf16.mxu0 0
    %1178 = vmatpush1.bf16.msra.mxu0 0
    %1179 = vmatprep.subr.bf16.mxu0 0
    %1180 = vmatpush1.bf16.msra.mxu0 0
    %1181 = vmatprep.subr.bf16.mxu0 0
    %1182 = vmatpush1.bf16.msra.mxu0 0
    %1183 = vmatprep.subr.bf16.mxu0 0
    %1184 = vmatpush1.bf16.msra.mxu0 0
    %1185 = vmatprep.subr.bf16.mxu0 0
    %1186 = vmatpush1.bf16.msra.mxu0 0
    %1187 = vmatprep.subr.bf16.mxu0 0
    %1188 = vmatpush1.bf16.msra.mxu0 0
    %1189 = vmatprep.subr.bf16.mxu0 0
    %1190 = vmatpush1.bf16.msra.mxu0 0
    %1191 = vmatprep.subr.bf16.mxu0 0
    %1192 = vmatpush1.bf16.msra.mxu0 0
    %1193 = vmatprep.subr.bf16.mxu0 0
    %1194 = vmatpush1.bf16.msra.mxu0 0
    %1195 = vmatprep.subr.bf16.mxu0 0
    %1196 = vmatpush1.bf16.msra.mxu0 0
    %1197 = vmatprep.subr.bf16.mxu0 0
    %1198 = vmatpush1.bf16.msra.mxu0 0
    %1199 = vmatprep.subr.bf16.mxu0 0
    %1200 = vmatpush1.bf16.msra.mxu0 0
    %1201 = vmatprep.subr.bf16.mxu0 0
    %1202 = vmatpush1.bf16.msra.mxu0 0
    %1203 = vmatprep.subr.bf16.mxu0 0
    %1204 = vmatpush1.bf16.msra.mxu0 0
    %1205 = vmatprep.mubr.bf16.mxu0 0
    %1206 = vmatmul.mubr.bf16.gmra.mrb[0].mxu0 %v1171
    %v1207 = vpop.f32.mrb[0].mxu0
    %v1208 = vadd.f32 0.0, %v1207
    %v1209 = vpop.f32.mrb[0].mxu0
    %v1210 = vpop.f32.mrb[0].mxu0
    %v1211 = vpop.f32.mrb[0].mxu0
    %1212 = vdwg.mxu0
    %v1213 = vadd.f32 %v1161, %v1208
    %v1214 = vxor.u32 %v1213, 2147483648
    %v1215 = vmul.f32 %v1214, 1.442695
    %v1216 = vpow.pop %v1215
    %v1217 = vadd.f32 %v1216, 1.0
    %v1218 = vrcp.pop %v1217
    %v1219 = vmul.f32 1.0, %v1218
    %v1220 = vadd.f32 %v1208, %v268
    %1222 = vrot.lane.b32.xlu0 %v1220, 64
    %v1223 = vpop.permute.xlu0 %1222
    %v1225 = vmul.f32 %v1219, %v1223
    %1227 = vrot.lane.b32.xlu0 %v1225, 64
    %v1228 = vpop.permute.xlu0 %1227
    %v1230 = vadd.f32 %v1161, %v1228
    %v1231 = vtanh.pop %v1230
    %v1232 = vsub.f32 1.0, %v1219
    %1234 = vrot.lane.b32.xlu0 %v1231, 96
    %v1235 = vpop.permute.xlu0 %1234
    %v1237 = vmul.f32 %v1232, %v1235
    %v1238 = vmul.f32 %v1219, %v1049
    %v1239 = vadd.f32 %v1237, %v1238
    %s1240 = scalar_lea.vmem %s0, 12
    %v1241 = vld [vmem:[%s1240] sm:$0x3]
    %1242 = vmatprep.subr.bf16.mxu0 0
    %1243 = vmatpush1.bf16.msra.mxu0 %v55
    %1244 = vmatprep.subr.bf16.mxu0 0
    %1245 = vmatpush1.bf16.msra.mxu0 %v56
    %1246 = vmatprep.subr.bf16.mxu0 0
    %1247 = vmatpush1.bf16.msra.mxu0 0
    %1248 = vmatprep.subr.bf16.mxu0 0
    %1249 = vmatpush1.bf16.msra.mxu0 0
    %1250 = vmatprep.subr.bf16.mxu0 0
    %1251 = vmatpush1.bf16.msra.mxu0 0
    %1252 = vmatprep.subr.bf16.mxu0 0
    %1253 = vmatpush1.bf16.msra.mxu0 0
    %1254 = vmatprep.subr.bf16.mxu0 0
    %1255 = vmatpush1.bf16.msra.mxu0 0
    %1256 = vmatprep.subr.bf16.mxu0 0
    %1257 = vmatpush1.bf16.msra.mxu0 0
    %1258 = vmatprep.subr.bf16.mxu0 0
    %1259 = vmatpush1.bf16.msra.mxu0 0
    %1260 = vmatprep.subr.bf16.mxu0 0
    %1261 = vmatpush1.bf16.msra.mxu0 0
    %1262 = vmatprep.subr.bf16.mxu0 0
    %1263 = vmatpush1.bf16.msra.mxu0 0
    %1264 = vmatprep.subr.bf16.mxu0 0
    %1265 = vmatpush1.bf16.msra.mxu0 0
    %1266 = vmatprep.subr.bf16.mxu0 0
    %1267 = vmatpush1.bf16.msra.mxu0 0
    %1268 = vmatprep.subr.bf16.mxu0 0
    %1269 = vmatpush1.bf16.msra.mxu0 0
    %1270 = vmatprep.subr.bf16.mxu0 0
    %1271 = vmatpush1.bf16.msra.mxu0 0
    %1272 = vmatprep.subr.bf16.mxu0 0
    %1273 = vmatpush1.bf16.msra.mxu0 0
    %1274 = vmatprep.mubr.bf16.mxu0 0
    %1275 = vmatmul.mubr.bf16.gmra.mrb[0].mxu0 %v1124
    %v1276 = vpop.f32.mrb[0].mxu0
    %v1277 = vadd.f32 0.0, %v1276
    %v1278 = vpop.f32.mrb[0].mxu0
    %v1279 = vpop.f32.mrb[0].mxu0
    %v1280 = vpop.f32.mrb[0].mxu0
    %1281 = vdwg.mxu0
    %v1282 = vadd.f32 %v1241, %v1277
    %v1283 = vxor.u32 %v1282, 2147483648
    %v1284 = vmul.f32 %v1283, 1.442695
    %v1285 = vpow.pop %v1284
    %v1286 = vadd.f32 %v1285, 1.0
    %v1287 = vrcp.pop %v1286
    %v1288 = vmul.f32 1.0, %v1287
    %v1289 = vadd.f32 %v1277, %v116
    %1291 = vrot.lane.b32.xlu0 %v1289, 64
    %v1292 = vpop.permute.xlu0 %1291
    %v1294 = vmul.f32 %v1288, %v1292
    %1296 = vrot.lane.b32.xlu0 %v1294, 64
    %v1297 = vpop.permute.xlu0 %1296
    %v1299 = vadd.f32 %v1241, %v1297
    %v1300 = vtanh.pop %v1299
    %v1301 = vsub.f32 1.0, %v1288
    %1303 = vrot.lane.b32.xlu0 %v1300, 96
    %v1304 = vpop.permute.xlu0 %1303
    %v1306 = vmul.f32 %v1301, %v1304
    %v1307 = vmul.f32 %v1288, %v1118
    %v1308 = vadd.f32 %v1306, %v1307
    %v1309 = vpack.c.bf16 %v1308, %v1308
    %1311 = vrot.lane.b32.xlu0 %v1309, 96
    %v1312 = vpop.permute.xlu0 %1311
    %v1314 = vsel %vm59, %v1312, 0
    %1316 = vmatprep.subr.bf16.mxu0 0
    %1317 = vmatpush1.bf16.msra.mxu0 %v156
    %1318 = vmatprep.subr.bf16.mxu0 0
    %1319 = vmatpush1.bf16.msra.mxu0 %v157
    %1320 = vmatprep.subr.bf16.mxu0 0
    %1321 = vmatpush1.bf16.msra.mxu0 0
    %1322 = vmatprep.subr.bf16.mxu0 0
    %1323 = vmatpush1.bf16.msra.mxu0 0
    %1324 = vmatprep.subr.bf16.mxu0 0
    %1325 = vmatpush1.bf16.msra.mxu0 0
    %1326 = vmatprep.subr.bf16.mxu0 0
    %1327 = vmatpush1.bf16.msra.mxu0 0
    %1328 = vmatprep.subr.bf16.mxu0 0
    %1329 = vmatpush1.bf16.msra.mxu0 0
    %1330 = vmatprep.subr.bf16.mxu0 0
    %1331 = vmatpush1.bf16.msra.mxu0 0
    %1332 = vmatprep.subr.bf16.mxu0 0
    %1333 = vmatpush1.bf16.msra.mxu0 0
    %1334 = vmatprep.subr.bf16.mxu0 0
    %1335 = vmatpush1.bf16.msra.mxu0 0
    %1336 = vmatprep.subr.bf16.mxu0 0
    %1337 = vmatpush1.bf16.msra.mxu0 0
    %1338 = vmatprep.subr.bf16.mxu0 0
    %1339 = vmatpush1.bf16.msra.mxu0 0
    %1340 = vmatprep.subr.bf16.mxu0 0
    %1341 = vmatpush1.bf16.msra.mxu0 0
    %1342 = vmatprep.subr.bf16.mxu0 0
    %1343 = vmatpush1.bf16.msra.mxu0 0
    %1344 = vmatprep.subr.bf16.mxu0 0
    %1345 = vmatpush1.bf16.msra.mxu0 0
    %1346 = vmatprep.subr.bf16.mxu0 0
    %1347 = vmatpush1.bf16.msra.mxu0 0
    %1348 = vmatprep.mubr.bf16.mxu0 0
    %1349 = vmatmul.mubr.bf16.gmra.mrb[0].mxu0 %v1314
    %v1350 = vpop.f32.mrb[0].mxu0
    %v1351 = vadd.f32 %v143, %v1350
    %v1352 = vpop.f32.mrb[0].mxu0
    %v1353 = vpop.f32.mrb[0].mxu0
    %v1354 = vpop.f32.mrb[0].mxu0
    %1355 = vdwg.mxu0
    %v1356 = vpack.c.bf16 %v1239, %v1239
    %1358 = vrot.lane.b32.xlu0 %v1356, 96
    %v1359 = vpop.permute.xlu0 %1358
    %v1361 = vsel %vm59, %v1359, 0
    %1363 = vmatprep.subr.bf16.mxu0 0
    %1364 = vmatpush1.bf16.msra.mxu0 %v211
    %1365 = vmatprep.subr.bf16.mxu0 0
    %1366 = vmatpush1.bf16.msra.mxu0 %v212
    %1367 = vmatprep.subr.bf16.mxu0 0
    %1368 = vmatpush1.bf16.msra.mxu0 0
    %1369 = vmatprep.subr.bf16.mxu0 0
    %1370 = vmatpush1.bf16.msra.mxu0 0
    %1371 = vmatprep.subr.bf16.mxu0 0
    %1372 = vmatpush1.bf16.msra.mxu0 0
    %1373 = vmatprep.subr.bf16.mxu0 0
    %1374 = vmatpush1.bf16.msra.mxu0 0
    %1375 = vmatprep.subr.bf16.mxu0 0
    %1376 = vmatpush1.bf16.msra.mxu0 0
    %1377 = vmatprep.subr.bf16.mxu0 0
    %1378 = vmatpush1.bf16.msra.mxu0 0
    %1379 = vmatprep.subr.bf16.mxu0 0
    %1380 = vmatpush1.bf16.msra.mxu0 0
    %1381 = vmatprep.subr.bf16.mxu0 0
    %1382 = vmatpush1.bf16.msra.mxu0 0
    %1383 = vmatprep.subr.bf16.mxu0 0
    %1384 = vmatpush1.bf16.msra.mxu0 0
    %1385 = vmatprep.subr.bf16.mxu0 0
    %1386 = vmatpush1.bf16.msra.mxu0 0
    %1387 = vmatprep.subr.bf16.mxu0 0
    %1388 = vmatpush1.bf16.msra.mxu0 0
    %1389 = vmatprep.subr.bf16.mxu0 0
    %1390 = vmatpush1.bf16.msra.mxu0 0
    %1391 = vmatprep.subr.bf16.mxu0 0
    %1392 = vmatpush1.bf16.msra.mxu0 0
    %1393 = vmatprep.subr.bf16.mxu0 0
    %1394 = vmatpush1.bf16.msra.mxu0 0
    %1395 = vmatprep.mubr.bf16.mxu0 0
    %1396 = vmatmul.mubr.bf16.gmra.mrb[0].mxu0 %v1361
    %v1397 = vpop.f32.mrb[0].mxu0
    %v1398 = vadd.f32 0.0, %v1397
    %v1399 = vpop.f32.mrb[0].mxu0
    %v1400 = vpop.f32.mrb[0].mxu0
    %v1401 = vpop.f32.mrb[0].mxu0
    %1402 = vdwg.mxu0
    %v1403 = vadd.f32 %v1351, %v1398
    %v1404 = vxor.u32 %v1403, 2147483648
    %v1405 = vmul.f32 %v1404, 1.442695
    %v1406 = vpow.pop %v1405
    %v1407 = vadd.f32 %v1406, 1.0
    %v1408 = vrcp.pop %v1407
    %v1409 = vmul.f32 1.0, %v1408
    %v1410 = vadd.f32 %v1398, %v268
    %1412 = vrot.lane.b32.xlu0 %v1410, 64
    %v1413 = vpop.permute.xlu0 %1412
    %v1415 = vmul.f32 %v1409, %v1413
    %1417 = vrot.lane.b32.xlu0 %v1415, 64
    %v1418 = vpop.permute.xlu0 %1417
    %v1420 = vadd.f32 %v1351, %v1418
    %v1421 = vtanh.pop %v1420
    %v1422 = vsub.f32 1.0, %v1409
    %1424 = vrot.lane.b32.xlu0 %v1421, 96
    %v1425 = vpop.permute.xlu0 %1424
    %v1427 = vmul.f32 %v1422, %v1425
    %v1428 = vmul.f32 %v1409, %v1239
    %v1429 = vadd.f32 %v1427, %v1428
    %s1430 = scalar_lea.vmem %s0, 14
    %v1431 = vld [vmem:[%s1430] sm:$0x3]
    %1432 = vmatprep.subr.bf16.mxu0 0
    %1433 = vmatpush1.bf16.msra.mxu0 %v55
    %1434 = vmatprep.subr.bf16.mxu0 0
    %1435 = vmatpush1.bf16.msra.mxu0 %v56
    %1436 = vmatprep.subr.bf16.mxu0 0
    %1437 = vmatpush1.bf16.msra.mxu0 0
    %1438 = vmatprep.subr.bf16.mxu0 0
    %1439 = vmatpush1.bf16.msra.mxu0 0
    %1440 = vmatprep.subr.bf16.mxu0 0
    %1441 = vmatpush1.bf16.msra.mxu0 0
    %1442 = vmatprep.subr.bf16.mxu0 0
    %1443 = vmatpush1.bf16.msra.mxu0 0
    %1444 = vmatprep.subr.bf16.mxu0 0
    %1445 = vmatpush1.bf16.msra.mxu0 0
    %1446 = vmatprep.subr.bf16.mxu0 0
    %1447 = vmatpush1.bf16.msra.mxu0 0
    %1448 = vmatprep.subr.bf16.mxu0 0
    %1449 = vmatpush1.bf16.msra.mxu0 0
    %1450 = vmatprep.subr.bf16.mxu0 0
    %1451 = vmatpush1.bf16.msra.mxu0 0
    %1452 = vmatprep.subr.bf16.mxu0 0
    %1453 = vmatpush1.bf16.msra.mxu0 0
    %1454 = vmatprep.subr.bf16.mxu0 0
    %1455 = vmatpush1.bf16.msra.mxu0 0
    %1456 = vmatprep.subr.bf16.mxu0 0
    %1457 = vmatpush1.bf16.msra.mxu0 0
    %1458 = vmatprep.subr.bf16.mxu0 0
    %1459 = vmatpush1.bf16.msra.mxu0 0
    %1460 = vmatprep.subr.bf16.mxu0 0
    %1461 = vmatpush1.bf16.msra.mxu0 0
    %1462 = vmatprep.subr.bf16.mxu0 0
    %1463 = vmatpush1.bf16.msra.mxu0 0
    %1464 = vmatprep.mubr.bf16.mxu0 0
    %1465 = vmatmul.mubr.bf16.gmra.mrb[0].mxu0 %v1314
    %v1466 = vpop.f32.mrb[0].mxu0
    %v1467 = vadd.f32 0.0, %v1466
    %v1468 = vpop.f32.mrb[0].mxu0
    %v1469 = vpop.f32.mrb[0].mxu0
    %v1470 = vpop.f32.mrb[0].mxu0
    %1471 = vdwg.mxu0
    %v1472 = vadd.f32 %v1431, %v1467
    %v1473 = vxor.u32 %v1472, 2147483648
    %v1474 = vmul.f32 %v1473, 1.442695
    %v1475 = vpow.pop %v1474
    %v1476 = vadd.f32 %v1475, 1.0
    %v1477 = vrcp.pop %v1476
    %v1478 = vmul.f32 1.0, %v1477
    %v1479 = vadd.f32 %v1467, %v116
    %1481 = vrot.lane.b32.xlu0 %v1479, 64
    %v1482 = vpop.permute.xlu0 %1481
    %v1484 = vmul.f32 %v1478, %v1482
    %1486 = vrot.lane.b32.xlu0 %v1484, 64
    %v1487 = vpop.permute.xlu0 %1486
    %v1489 = vadd.f32 %v1431, %v1487
    %v1490 = vtanh.pop %v1489
    %v1491 = vsub.f32 1.0, %v1478
    %1493 = vrot.lane.b32.xlu0 %v1490, 96
    %v1494 = vpop.permute.xlu0 %1493
    %v1496 = vmul.f32 %v1491, %v1494
    %v1497 = vmul.f32 %v1478, %v1308
    %v1498 = vadd.f32 %v1496, %v1497
    %v1499 = vpack.c.bf16 %v1498, %v1498
    %1501 = vrot.lane.b32.xlu0 %v1499, 96
    %v1502 = vpop.permute.xlu0 %1501
    %v1504 = vsel %vm59, %v1502, 0
    %1506 = vmatprep.subr.bf16.mxu0 0
    %1507 = vmatpush1.bf16.msra.mxu0 %v156
    %1508 = vmatprep.subr.bf16.mxu0 0
    %1509 = vmatpush1.bf16.msra.mxu0 %v157
    %1510 = vmatprep.subr.bf16.mxu0 0
    %1511 = vmatpush1.bf16.msra.mxu0 0
    %1512 = vmatprep.subr.bf16.mxu0 0
    %1513 = vmatpush1.bf16.msra.mxu0 0
    %1514 = vmatprep.subr.bf16.mxu0 0
    %1515 = vmatpush1.bf16.msra.mxu0 0
    %1516 = vmatprep.subr.bf16.mxu0 0
    %1517 = vmatpush1.bf16.msra.mxu0 0
    %1518 = vmatprep.subr.bf16.mxu0 0
    %1519 = vmatpush1.bf16.msra.mxu0 0
    %1520 = vmatprep.subr.bf16.mxu0 0
    %1521 = vmatpush1.bf16.msra.mxu0 0
    %1522 = vmatprep.subr.bf16.mxu0 0
    %1523 = vmatpush1.bf16.msra.mxu0 0
    %1524 = vmatprep.subr.bf16.mxu0 0
    %1525 = vmatpush1.bf16.msra.mxu0 0
    %1526 = vmatprep.subr.bf16.mxu0 0
    %1527 = vmatpush1.bf16.msra.mxu0 0
    %1528 = vmatprep.subr.bf16.mxu0 0
    %1529 = vmatpush1.bf16.msra.mxu0 0
    %1530 = vmatprep.subr.bf16.mxu0 0
    %1531 = vmatpush1.bf16.msra.mxu0 0
    %1532 = vmatprep.subr.bf16.mxu0 0
    %1533 = vmatpush1.bf16.msra.mxu0 0
    %1534 = vmatprep.subr.bf16.mxu0 0
    %1535 = vmatpush1.bf16.msra.mxu0 0
    %1536 = vmatprep.subr.bf16.mxu0 0
    %1537 = vmatpush1.bf16.msra.mxu0 0
    %1538 = vmatprep.mubr.bf16.mxu0 0
    %1539 = vmatmul.mubr.bf16.gmra.mrb[0].mxu0 %v1504
    %v1540 = vpop.f32.mrb[0].mxu0
    %v1541 = vadd.f32 %v143, %v1540
    %v1542 = vpop.f32.mrb[0].mxu0
    %v1543 = vpop.f32.mrb[0].mxu0
    %v1544 = vpop.f32.mrb[0].mxu0
    %1545 = vdwg.mxu0
    %v1546 = vpack.c.bf16 %v1429, %v1429
    %1548 = vrot.lane.b32.xlu0 %v1546, 96
    %v1549 = vpop.permute.xlu0 %1548
    %v1551 = vsel %vm59, %v1549, 0
    %1553 = vmatprep.subr.bf16.mxu0 0
    %1554 = vmatpush1.bf16.msra.mxu0 %v211
    %1555 = vmatprep.subr.bf16.mxu0 0
    %1556 = vmatpush1.bf16.msra.mxu0 %v212
    %1557 = vmatprep.subr.bf16.mxu0 0
    %1558 = vmatpush1.bf16.msra.mxu0 0
    %1559 = vmatprep.subr.bf16.mxu0 0
    %1560 = vmatpush1.bf16.msra.mxu0 0
    %1561 = vmatprep.subr.bf16.mxu0 0
    %1562 = vmatpush1.bf16.msra.mxu0 0
    %1563 = vmatprep.subr.bf16.mxu0 0
    %1564 = vmatpush1.bf16.msra.mxu0 0
    %1565 = vmatprep.subr.bf16.mxu0 0
    %1566 = vmatpush1.bf16.msra.mxu0 0
    %1567 = vmatprep.subr.bf16.mxu0 0
    %1568 = vmatpush1.bf16.msra.mxu0 0
    %1569 = vmatprep.subr.bf16.mxu0 0
    %1570 = vmatpush1.bf16.msra.mxu0 0
    %1571 = vmatprep.subr.bf16.mxu0 0
    %1572 = vmatpush1.bf16.msra.mxu0 0
    %1573 = vmatprep.subr.bf16.mxu0 0
    %1574 = vmatpush1.bf16.msra.mxu0 0
    %1575 = vmatprep.subr.bf16.mxu0 0
    %1576 = vmatpush1.bf16.msra.mxu0 0
    %1577 = vmatprep.subr.bf16.mxu0 0
    %1578 = vmatpush1.bf16.msra.mxu0 0
    %1579 = vmatprep.subr.bf16.mxu0 0
    %1580 = vmatpush1.bf16.msra.mxu0 0
    %1581 = vmatprep.subr.bf16.mxu0 0
    %1582 = vmatpush1.bf16.msra.mxu0 0
    %1583 = vmatprep.subr.bf16.mxu0 0
    %1584 = vmatpush1.bf16.msra.mxu0 0
    %1585 = vmatprep.mubr.bf16.mxu0 0
    %1586 = vmatmul.mubr.bf16.gmra.mrb[0].mxu0 %v1551
    %v1587 = vpop.f32.mrb[0].mxu0
    %v1588 = vadd.f32 0.0, %v1587
    %v1589 = vpop.f32.mrb[0].mxu0
    %v1590 = vpop.f32.mrb[0].mxu0
    %v1591 = vpop.f32.mrb[0].mxu0
    %1592 = vdwg.mxu0
    %v1593 = vadd.f32 %v1541, %v1588
    %v1594 = vxor.u32 %v1593, 2147483648
    %v1595 = vmul.f32 %v1594, 1.442695
    %v1596 = vpow.pop %v1595
    %v1597 = vadd.f32 %v1596, 1.0
    %v1598 = vrcp.pop %v1597
    %v1599 = vmul.f32 1.0, %v1598
    %v1600 = vadd.f32 %v1588, %v268
    %1602 = vrot.lane.b32.xlu0 %v1600, 64
    %v1603 = vpop.permute.xlu0 %1602
    %v1605 = vmul.f32 %v1599, %v1603
    %1607 = vrot.lane.b32.xlu0 %v1605, 64
    %v1608 = vpop.permute.xlu0 %1607
    %v1610 = vadd.f32 %v1541, %v1608
    %v1611 = vtanh.pop %v1610
    %v1612 = vsub.f32 1.0, %v1599
    %1614 = vrot.lane.b32.xlu0 %v1611, 96
    %v1615 = vpop.permute.xlu0 %1614
    %v1617 = vmul.f32 %v1612, %v1615
    %v1618 = vmul.f32 %v1599, %v1429
    %v1619 = vadd.f32 %v1617, %v1618
    %1621 = vrot.lane.b32.xlu0 %v1498, 96
    %v1622 = vpop.permute.xlu0 %1621
    %vm1624 = vcmask 254976
    %1625 = vst.msk [vmem:[#allocation2] sm:$0x3] %vm1624, %v1622
    %1627 = vrot.lane.b32.xlu0 %v1619, 96
    %v1628 = vpop.permute.xlu0 %1627
    %1630 = vst.msk [vmem:[#allocation4] sm:$0x3] %vm1624, %v1628
    // Predicated region
    $region30: #{encoder_forward.1} parent=1 // pred_check
      _
    $region31: #{encoder_forward.1} parent=1 // pred_check_branch
      %1632 = sbr.rel (0) target = $region33
    $region32: #{encoder_forward.1} parent=1 // pred_region
      %s1634 = ssub.s32 32, 32
      %1635 = vsyncadd [#allocation3], %s1634
      %s1637 = sshll.u32 [#allocation2], 4
      %s1638 = int_to_ptr.vmem [resolvable:$true] %s1637
      %1640 = dma.vmem_to_hbm [thread:$0]  %s1638, 32, %s7, [#allocation3]
    $region33: #{encoder_forward.1} parent=1 // pred_fallthru
      _
    // Predicated region
    $region34: #{encoder_forward.1} parent=1 // pred_check
      _
    $region35: #{encoder_forward.1} parent=1 // pred_check_branch
      %1642 = sbr.rel (0) target = $region37
    $region36: #{encoder_forward.1} parent=1 // pred_region
      %s1644 = ssub.s32 32, 32
      %1645 = vsyncadd [#allocation5], %s1644
      %s1647 = sshll.u32 [#allocation4], 4
      %s1648 = int_to_ptr.vmem [resolvable:$true] %s1647
      %1650 = dma.vmem_to_hbm [thread:$0]  %s1648, 32, %s8, [#allocation5]
    $region37: #{encoder_forward.1} parent=1 // pred_fallthru
      _
    // Predicated region
    $region38: #{encoder_forward.1} parent=1 // pred_check
      _
    $region39: #{encoder_forward.1} parent=1 // pred_check_branch
      %1652 = sbr.rel (0) target = $region41
    $region40: #{encoder_forward.1} parent=1 // pred_region
      %1653 = dma.done [#allocation3], 32
    $region41: #{encoder_forward.1} parent=1 // pred_fallthru
      _
    // Predicated region
    $region42: #{encoder_forward.1} parent=1 // pred_check
      _
    $region43: #{encoder_forward.1} parent=1 // pred_check_branch
      %1655 = sbr.rel (0) target = $region45
    $region44: #{encoder_forward.1} parent=1 // pred_region
      %1656 = dma.done [#allocation5], 32
    $region45: #{encoder_forward.1} parent=1 // pred_fallthru
      _
    %1657 = vsyncpa [#allocation3], 1
    %1658 = vsyncpa [#allocation5], 1

</llo_original>
